<compile_context>
chip_gen: v6e
topology: v6e:2x2x1
jax: 0.10.0
libtpu: 0.0.40
codegen_flags: <defaults>
</compile_context>

<pallas_src>
import jax
import jax.numpy as jnp
from jax import lax
from jax.experimental import pallas as pl
from jax.experimental.pallas import tpu as pltpu


# ------------------------- constant (weight) prep --------------------------- #

def _banded_weights(w_hwio, width):
    """Fold a (3,3,Cin,Cout) HWIO kernel into 3 banded matrices M[dy] of shape
    (W*Cin, W*Cout) so that for a lane-folded image row r (lane = w*Cin + ci),
    r @ M[dy] is that row's dy-tap contribution to the conv output row
    (lane = w*Cout + co).  Left/right SAME-padding zeros are baked into the
    band structure (taps falling outside [0, W) are masked out)."""
    kh, kw, cin, cout = w_hwio.shape
    K, ncol = width * cin, width * cout
    k = jnp.arange(K)
    col = jnp.arange(ncol)
    p, ci = k // cin, k % cin                   # input column / channel
    w_out, co = col // cout, col % cout         # output column / channel
    dx = p[:, None] - w_out[None, :] + 1        # horizontal tap index
    valid = (dx >= 0) & (dx < kw)
    dxc = jnp.clip(dx, 0, kw - 1)
    m = w_hwio[:, dxc, ci[:, None], co[None, :]]          # (kh, K, ncol)
    return jnp.where(valid[None], m, 0.0).astype(jnp.float32)


def _pool_matrices(H, W, cout, nb, blk, mrows):
    """0/1 gather matrices for the fused 2x2 max pool over a multi-image slab.

    s[2k+a] : (H//2, mrows)          picks slab rows of image k at row 2i+a.
    p[2k+b] : (W*cout, nb*(W//2)*cout) picks column group 2j+b of image k and
              places it into image k's lane range (lane-dense packed pool)."""
    t = jnp.arange(mrows)
    i = jnp.arange(H // 2)
    half = (W // 2) * cout
    wk, ck = jnp.arange(W * cout) // cout, jnp.arange(W * cout) % cout
    jc, cc = jnp.arange(half) // cout, jnp.arange(half) % cout
    s_list, p_list = [], []
    for k in range(nb):
        for a in (0, 1):
            s_list.append(
                (t[None, :] == (k * blk + 2 * i[:, None] + a)).astype(jnp.float32))
        for b in (0, 1):
            block = ((wk[:, None] == 2 * jc[None, :] + b) &
                     (ck[:, None] == cc[None, :])).astype(jnp.float32)
            pm = jnp.zeros((W * cout, nb * half), jnp.float32)
            pm = pm.at[:, k * half:(k + 1) * half].set(block)
            p_list.append(pm)
    return jnp.stack(s_list), jnp.stack(p_list)


def _default_images_per_step(batch):
    """1 grid step on single-TC chips (v5e/v6e); 2 'parallel' steps on v7x."""
    try:
        kind = jax.devices()[0].device_kind.lower()
    except Exception:
        kind = ""
    if "v7" in kind and batch >= 2 and batch % 2 == 0:
        return batch // 2          # 2 grid steps, one per v7x TensorCore
    return batch                   # single grid step


# ------------------------------ encoder builder ----------------------------- #

def make_encoder(params, *, in_c, features, H, W, batch, images_per_step=None):
    """Builds all kernel constants ONCE and returns the forward callable."""
    w1, b1, w2, b2 = params
    c1 = c2 = features

    nb = images_per_step if images_per_step is not None else _default_images_per_step(batch)
    assert batch % nb == 0
    steps = batch // nb
    blk = H + 2                      # slab rows per image (1 pad + H data + 1 pad)
    ms = nb * blk - 2                # rows produced by each banded dot

    kin = W * in_c                   # lane-folded widths
    k1w = W * c1
    k2w = W * c2
    half2 = (W // 2) * c2

    # Precomputed constants (outside the jitted forward).
    m1 = _banded_weights(w1.astype(jnp.float32), W)          # (3, kin, k1w)
    m2 = _banded_weights(w2.astype(jnp.float32), W)          # (3, k1w, k2w)
    b1f = jnp.tile(b1.astype(jnp.float32), W).reshape(1, k1w)
    b2f = jnp.tile(b2.astype(jnp.float32), W).reshape(1, k2w)
    s_pool, p_pool = _pool_matrices(H, W, c2, nb, blk, ms)   # (2nb,H//2,ms), (2nb,k2w,nb*half2)

    conv_flops = steps * 6 * ms * (kin * k1w + k1w * k2w)
    pool_flops = steps * nb * (4 * (H // 2) * ms * k2w + 4 * (H // 2) * k2w * nb * half2)
    bytes_acc = 4 * (batch * H * kin + m1.size + m2.size + b1f.size + b2f.size +
                     s_pool.size + p_pool.size + batch * H * k2w +
                     steps * (H // 2) * nb * half2)
    cost = pl.CostEstimate(flops=int(conv_flops + pool_flops),
                           transcendentals=0,
                           bytes_accessed=int(bytes_acc))

    # --------------------------------- kernel ------------------------------- #
    def kernel(x_ref, m1_ref, b1_ref, m2_ref, b2_ref, s_ref, p_ref,
               out_ref, pool_ref, xp, y1p):
        zin = jnp.zeros((1, kin), jnp.float32)
        z1 = jnp.zeros((1, k1w), jnp.float32)

        # Pack nb images into the row-padded slab; zero ONLY the border rows.
        for k in range(nb):
            base = k * blk
            xp[base:base + 1, :] = zin                       # top pad row
            xp[base + H + 1:base + H + 2, :] = zin           # bottom pad row
            xp[base + 1:base + 1 + H, :] = x_ref[k]          # lane-aligned interior

        # conv1: three banded dots over the whole slab, bias + ReLU.
        acc1 = jnp.dot(xp[0:ms, :], m1_ref[0], preferred_element_type=jnp.float32)
        for dy in (1, 2):
            acc1 = acc1 + jnp.dot(xp[dy:dy + ms, :], m1_ref[dy],
                                  preferred_element_type=jnp.float32)
        y1 = jnp.maximum(acc1 + b1_ref[...], 0.0)            # (ms, k1w)

        # conv1 activations stay in VMEM: one row-shifted store re-pads them;
        # the shifted inter-image garbage rows land exactly on the pad rows
        # and are overwritten by the border zeroing below.
        y1p[1:ms + 1, :] = y1
        for k in range(nb):
            base = k * blk
            y1p[base:base + 1, :] = z1
            y1p[base + H + 1:base + H + 2, :] = z1

        # conv2
        acc2 = jnp.dot(y1p[0:ms, :], m2_ref[0], preferred_element_type=jnp.float32)
        for dy in (1, 2):
            acc2 = acc2 + jnp.dot(y1p[dy:dy + ms, :], m2_ref[dy],
                                  preferred_element_type=jnp.float32)
        y2 = jnp.maximum(acc2 + b2_ref[...], 0.0)            # (ms, k2w)

        # Pre-pool features: one lane-dense (H, W*c2) store per image.
        for k in range(nb):
            out_ref[k] = y2[k * blk:k * blk + H].astype(out_ref.dtype)

        # Fused 2x2 max-pool via 0/1 gather matmuls; each image's pooled tile
        # is placed in its own lane range -> 128-lane dense store for nb even.
        pooled = None
        for k in range(nb):
            rk = jnp.maximum(
                jnp.dot(s_ref[2 * k], y2, preferred_element_type=jnp.float32),
                jnp.dot(s_ref[2 * k + 1], y2, preferred_element_type=jnp.float32))
            pk = jnp.maximum(
                jnp.dot(rk, p_ref[2 * k], preferred_element_type=jnp.float32),
                jnp.dot(rk, p_ref[2 * k + 1], preferred_element_type=jnp.float32))
            pooled = pk if pooled is None else pooled + pk
        pool_ref[...] = pooled.astype(pool_ref.dtype)

    # -------------------------------- forward ------------------------------- #
    def forward(x_nchw):
        # NCHW -> NHWC -> lane-folded (N, H, W*Cin): layout glue only.
        x2 = jnp.transpose(x_nchw, (0, 2, 3, 1)).astype(jnp.float32)
        x2 = x2.reshape(batch, H, kin)

        out2, pool2 = pl.pallas_call(
            kernel,
            out_shape=(
                jax.ShapeDtypeStruct((batch, H, k2w), jnp.float32),
                jax.ShapeDtypeStruct((steps, H // 2, nb * half2), jnp.float32),
            ),
            grid=(steps,),
            in_specs=[
                pl.BlockSpec((nb, H, kin), lambda s: (s, 0, 0)),
                pl.BlockSpec((3, kin, k1w), lambda s: (0, 0, 0)),
                pl.BlockSpec((1, k1w), lambda s: (0, 0)),
                pl.BlockSpec((3, k1w, k2w), lambda s: (0, 0, 0)),
                pl.BlockSpec((1, k2w), lambda s: (0, 0)),
                pl.BlockSpec((2 * nb, H // 2, ms), lambda s: (0, 0, 0)),
                pl.BlockSpec((2 * nb, k2w, nb * half2), lambda s: (0, 0, 0)),
            ],
            out_specs=[
                pl.BlockSpec((nb, H, k2w), lambda s: (s, 0, 0)),
                pl.BlockSpec((None, H // 2, nb * half2), lambda s: (s, 0, 0)),
            ],
            scratch_shapes=[
                pltpu.VMEM((nb * blk, kin), jnp.float32),   # row-padded input slab
                pltpu.VMEM((nb * blk, k1w), jnp.float32),   # row-padded conv1 slab
            ],
            compiler_params=pltpu.CompilerParams(
                dimension_semantics=("parallel",)),
            cost_estimate=cost,
        )(x2, m1, b1f, m2, b2f, s_pool, p_pool)

        out = jnp.transpose(out2.reshape(batch, H, W, c2), (0, 3, 1, 2))
        p = pool2.reshape(steps, H // 2, nb, W // 2, c2)
        p = jnp.transpose(p, (0, 2, 4, 1, 3)).reshape(batch, c2, H // 2, W // 2)
        return p, out

    return forward


# ---------------------- params / pure-JAX reference ------------------------- #

def init_params(key, in_c, features):
    """Deterministic init mimicking PyTorch Conv2d defaults; weights in HWIO."""
    k1, k2, k3, k4 = jax.random.split(key, 4)
    bound1 = 1.0 / float((in_c * 9) ** 0.5)
    w1 = jax.random.uniform(k1, (3, 3, in_c, features), jnp.float32, -bound1, bound1)
    b1 = jax.random.uniform(k2, (features,), jnp.float32, -bound1, bound1)
    bound2 = 1.0 / float((features * 9) ** 0.5)
    w2 = jax.random.uniform(k3, (3, 3, features, features), jnp.float32, -bound2, bound2)
    b2 = jax.random.uniform(k4, (features,), jnp.float32, -bound2, bound2)
    return w1, b1, w2, b2


def encoder_reference(x_nchw, params):
    w1, b1, w2, b2 = params
    x = jnp.transpose(x_nchw, (0, 2, 3, 1))
    dn = lax.conv_dimension_numbers(x.shape, w1.shape, ("NHWC", "HWIO", "NHWC"))
    y = lax.conv_general_dilated(x, w1, (1, 1), "SAME", dimension_numbers=dn) + b1
    y = jnp.maximum(y, 0.0)
    dn2 = lax.conv_dimension_numbers(y.shape, w2.shape, ("NHWC", "HWIO", "NHWC"))
    y = lax.conv_general_dilated(y, w2, (1, 1), "SAME", dimension_numbers=dn2) + b2
    y = jnp.maximum(y, 0.0)
    p = lax.reduce_window(y, -jnp.inf, lax.max, (1, 2, 2, 1), (1, 2, 2, 1), "VALID")
    return jnp.transpose(p, (0, 3, 1, 2)), jnp.transpose(y, (0, 3, 1, 2))


# --------------------------------- main -------------------------------------- #

if __name__ == "__main__":
    key = jax.random.PRNGKey(0)
    kx, kp = jax.random.split(key)
    N, in_c, features, H, W = 2, 4, 8, 16, 16
    x = jax.random.normal(kx, (N, in_c, H, W), jnp.float32)   # NCHW like PyTorch
    params = init_params(kp, in_c, features)

    encoder = jax.jit(make_encoder(params, in_c=in_c, features=features,
                                   H=H, W=W, batch=N))
    p, out = encoder(x)
    jax.block_until_ready((p, out))

    p_want, out_want = encoder_reference(x, params)
    assert p.shape == (N, features, H // 2, W // 2)
    assert out.shape == (N, features, H, W)
    assert jnp.allclose(out, out_want, atol=2e-4, rtol=2e-4)
    assert jnp.allclose(p, p_want, atol=2e-4, rtol=2e-4)
    print("KERNEL_OK")
</pallas_src>

<mosaic_0001>
module attributes {stable_mosaic.version = 11 : i64} {
  func.func @kernel(%arg0: i32, %arg1: memref<2x16x64xf32, #tpu.memory_space<vmem>>, %arg2: memref<3x64x128xf32, #tpu.memory_space<vmem>>, %arg3: memref<1x128xf32, #tpu.memory_space<vmem>>, %arg4: memref<3x128x128xf32, #tpu.memory_space<vmem>>, %arg5: memref<1x128xf32, #tpu.memory_space<vmem>>, %arg6: memref<4x8x34xf32, #tpu.memory_space<vmem>>, %arg7: memref<4x128x128xf32, #tpu.memory_space<vmem>>, %arg8: memref<2x16x128xf32, #tpu.memory_space<vmem>>, %arg9: memref<1x8x128xf32, #tpu.memory_space<vmem>>, %arg10: memref<36x64xf32, #tpu.memory_space<vmem>>, %arg11: memref<36x128xf32, #tpu.memory_space<vmem>>) attributes {dimension_semantics = [#tpu.dimension_semantics<parallel>], iteration_bounds = array<i64: 1>, scalar_prefetch = 0 : i64, scratch_operands = 2 : i64, tpu.core_type = #tpu.core_type<tc>, window_params = [{transform_indices = @transform_0, window_bounds = array<i64: 2, 16, 64>}, {pipeline_mode = #tpu.pipeline_mode<synchronous>, transform_indices = @transform_1, window_bounds = array<i64: 3, 64, 128>}, {pipeline_mode = #tpu.pipeline_mode<synchronous>, transform_indices = @transform_2, window_bounds = array<i64: 1, 128>}, {pipeline_mode = #tpu.pipeline_mode<synchronous>, transform_indices = @transform_3, window_bounds = array<i64: 3, 128, 128>}, {pipeline_mode = #tpu.pipeline_mode<synchronous>, transform_indices = @transform_4, window_bounds = array<i64: 1, 128>}, {pipeline_mode = #tpu.pipeline_mode<synchronous>, transform_indices = @transform_5, window_bounds = array<i64: 4, 8, 34>}, {pipeline_mode = #tpu.pipeline_mode<synchronous>, transform_indices = @transform_6, window_bounds = array<i64: 4, 128, 128>}, {transform_indices = @transform_7, window_bounds = array<i64: 2, 16, 128>}, {transform_indices = @transform_8, window_bounds = array<i64: 1, 8, 128>}]} {
    %cst = arith.constant 0.000000e+00 : f32
    %0 = vector.broadcast %cst : f32 to vector<1x64xf32>
    %cst_0 = arith.constant 0.000000e+00 : f32
    %1 = vector.broadcast %cst_0 : f32 to vector<1x128xf32>
    %c0 = arith.constant 0 : index
    %c0_1 = arith.constant 0 : index
    %2 = vector.load %arg10[%c0, %c0_1] : memref<36x64xf32, #tpu.memory_space<vmem>>, vector<1x64xf32>
    tpu.vector_store %arg10[%c0, %c0_1], %0 {strides = array<i32>} : memref<36x64xf32, #tpu.memory_space<vmem>>, vector<1x64xf32>,
    %c17 = arith.constant 17 : index
    %c0_2 = arith.constant 0 : index
    %3 = vector.load %arg10[%c17, %c0_2] : memref<36x64xf32, #tpu.memory_space<vmem>>, vector<1x64xf32>
    tpu.vector_store %arg10[%c17, %c0_2], %0 {strides = array<i32>} : memref<36x64xf32, #tpu.memory_space<vmem>>, vector<1x64xf32>,
    %c0_3 = arith.constant 0 : index
    %c0_4 = arith.constant 0 : index
    %c0_5 = arith.constant 0 : index
    %4 = vector.load %arg1[%c0_3, %c0_4, %c0_5] : memref<2x16x64xf32, #tpu.memory_space<vmem>>, vector<1x16x64xf32>
    %5 = vector.shape_cast %4 : vector<1x16x64xf32> to vector<16x64xf32>
    %c1 = arith.constant 1 : index
    %c0_6 = arith.constant 0 : index
    %6 = vector.load %arg10[%c1, %c0_6] : memref<36x64xf32, #tpu.memory_space<vmem>>, vector<16x64xf32>
    tpu.vector_store %arg10[%c1, %c0_6], %5 {strides = array<i32>} : memref<36x64xf32, #tpu.memory_space<vmem>>, vector<16x64xf32>,
    %c18 = arith.constant 18 : index
    %c0_7 = arith.constant 0 : index
    %7 = vector.load %arg10[%c18, %c0_7] : memref<36x64xf32, #tpu.memory_space<vmem>>, vector<1x64xf32>
    tpu.vector_store %arg10[%c18, %c0_7], %0 {strides = array<i32>} : memref<36x64xf32, #tpu.memory_space<vmem>>, vector<1x64xf32>,
    %c35 = arith.constant 35 : index
    %c0_8 = arith.constant 0 : index
    %8 = vector.load %arg10[%c35, %c0_8] : memref<36x64xf32, #tpu.memory_space<vmem>>, vector<1x64xf32>
    tpu.vector_store %arg10[%c35, %c0_8], %0 {strides = array<i32>} : memref<36x64xf32, #tpu.memory_space<vmem>>, vector<1x64xf32>,
    %c1_9 = arith.constant 1 : index
    %c0_10 = arith.constant 0 : index
    %c0_11 = arith.constant 0 : index
    %9 = vector.load %arg1[%c1_9, %c0_10, %c0_11] : memref<2x16x64xf32, #tpu.memory_space<vmem>>, vector<1x16x64xf32>
    %10 = vector.shape_cast %9 : vector<1x16x64xf32> to vector<16x64xf32>
    %c19 = arith.constant 19 : index
    %c0_12 = arith.constant 0 : index
    %11 = vector.load %arg10[%c19, %c0_12] : memref<36x64xf32, #tpu.memory_space<vmem>>, vector<16x64xf32>
    tpu.vector_store %arg10[%c19, %c0_12], %10 {strides = array<i32>} : memref<36x64xf32, #tpu.memory_space<vmem>>, vector<16x64xf32>,
    %c0_13 = arith.constant 0 : index
    %c0_14 = arith.constant 0 : index
    %12 = vector.load %arg10[%c0_13, %c0_14] : memref<36x64xf32, #tpu.memory_space<vmem>>, vector<34x64xf32>
    %c0_15 = arith.constant 0 : index
    %c0_16 = arith.constant 0 : index
    %c0_17 = arith.constant 0 : index
    %13 = vector.load %arg2[%c0_15, %c0_16, %c0_17] : memref<3x64x128xf32, #tpu.memory_space<vmem>>, vector<1x64x128xf32>
    %14 = vector.shape_cast %13 : vector<1x64x128xf32> to vector<64x128xf32>
    %cst_18 = arith.constant dense<0.000000e+00> : vector<34x128xf32>
    %15 = tpu.matmul %12, %14, %cst_18 {dimension_numbers = #tpu.dot_dimension_numbers<[1], [0], [0], [1], [0, 0, 1, 1], [], []>} : vector<34x64xf32>, vector<64x128xf32>, vector<34x128xf32> -> vector<34x128xf32>
    %c1_19 = arith.constant 1 : index
    %c0_20 = arith.constant 0 : index
    %16 = vector.load %arg10[%c1_19, %c0_20] : memref<36x64xf32, #tpu.memory_space<vmem>>, vector<34x64xf32>
    %c1_21 = arith.constant 1 : index
    %c0_22 = arith.constant 0 : index
    %c0_23 = arith.constant 0 : index
    %17 = vector.load %arg2[%c1_21, %c0_22, %c0_23] : memref<3x64x128xf32, #tpu.memory_space<vmem>>, vector<1x64x128xf32>
    %18 = vector.shape_cast %17 : vector<1x64x128xf32> to vector<64x128xf32>
    %cst_24 = arith.constant dense<0.000000e+00> : vector<34x128xf32>
    %19 = tpu.matmul %16, %18, %cst_24 {dimension_numbers = #tpu.dot_dimension_numbers<[1], [0], [0], [1], [0, 0, 1, 1], [], []>} : vector<34x64xf32>, vector<64x128xf32>, vector<34x128xf32> -> vector<34x128xf32>
    %20 = arith.addf %15, %19 : vector<34x128xf32>
    %c2 = arith.constant 2 : index
    %c0_25 = arith.constant 0 : index
    %21 = vector.load %arg10[%c2, %c0_25] : memref<36x64xf32, #tpu.memory_space<vmem>>, vector<34x64xf32>
    %c2_26 = arith.constant 2 : index
    %c0_27 = arith.constant 0 : index
    %c0_28 = arith.constant 0 : index
    %22 = vector.load %arg2[%c2_26, %c0_27, %c0_28] : memref<3x64x128xf32, #tpu.memory_space<vmem>>, vector<1x64x128xf32>
    %23 = vector.shape_cast %22 : vector<1x64x128xf32> to vector<64x128xf32>
    %cst_29 = arith.constant dense<0.000000e+00> : vector<34x128xf32>
    %24 = tpu.matmul %21, %23, %cst_29 {dimension_numbers = #tpu.dot_dimension_numbers<[1], [0], [0], [1], [0, 0, 1, 1], [], []>} : vector<34x64xf32>, vector<64x128xf32>, vector<34x128xf32> -> vector<34x128xf32>
    %25 = arith.addf %20, %24 : vector<34x128xf32>
    %c0_30 = arith.constant 0 : index
    %c0_31 = arith.constant 0 : index
    %26 = vector.load %arg3[%c0_30, %c0_31] : memref<1x128xf32, #tpu.memory_space<vmem>>, vector<1x128xf32>
    %27 = vector.broadcast %26 : vector<1x128xf32> to vector<34x128xf32>
    %28 = arith.addf %25, %27 : vector<34x128xf32>
    %cst_32 = arith.constant 0.000000e+00 : f32
    %29 = vector.broadcast %cst_32 : f32 to vector<34x128xf32>
    %30 = arith.maximumf %28, %29 : vector<34x128xf32>
    %c1_33 = arith.constant 1 : index
    %c0_34 = arith.constant 0 : index
    %31 = vector.load %arg11[%c1_33, %c0_34] : memref<36x128xf32, #tpu.memory_space<vmem>>, vector<34x128xf32>
    tpu.vector_store %arg11[%c1_33, %c0_34], %30 {strides = array<i32>} : memref<36x128xf32, #tpu.memory_space<vmem>>, vector<34x128xf32>,
    %c0_35 = arith.constant 0 : index
    %c0_36 = arith.constant 0 : index
    %32 = vector.load %arg11[%c0_35, %c0_36] : memref<36x128xf32, #tpu.memory_space<vmem>>, vector<1x128xf32>
    tpu.vector_store %arg11[%c0_35, %c0_36], %1 {strides = array<i32>} : memref<36x128xf32, #tpu.memory_space<vmem>>, vector<1x128xf32>,
    %c17_37 = arith.constant 17 : index
    %c0_38 = arith.constant 0 : index
    %33 = vector.load %arg11[%c17_37, %c0_38] : memref<36x128xf32, #tpu.memory_space<vmem>>, vector<1x128xf32>
    tpu.vector_store %arg11[%c17_37, %c0_38], %1 {strides = array<i32>} : memref<36x128xf32, #tpu.memory_space<vmem>>, vector<1x128xf32>,
    %c18_39 = arith.constant 18 : index
    %c0_40 = arith.constant 0 : index
    %34 = vector.load %arg11[%c18_39, %c0_40] : memref<36x128xf32, #tpu.memory_space<vmem>>, vector<1x128xf32>
    tpu.vector_store %arg11[%c18_39, %c0_40], %1 {strides = array<i32>} : memref<36x128xf32, #tpu.memory_space<vmem>>, vector<1x128xf32>,
    %c35_41 = arith.constant 35 : index
    %c0_42 = arith.constant 0 : index
    %35 = vector.load %arg11[%c35_41, %c0_42] : memref<36x128xf32, #tpu.memory_space<vmem>>, vector<1x128xf32>
    tpu.vector_store %arg11[%c35_41, %c0_42], %1 {strides = array<i32>} : memref<36x128xf32, #tpu.memory_space<vmem>>, vector<1x128xf32>,
    %c0_43 = arith.constant 0 : index
    %c0_44 = arith.constant 0 : index
    %36 = vector.load %arg11[%c0_43, %c0_44] : memref<36x128xf32, #tpu.memory_space<vmem>>, vector<34x128xf32>
    %c0_45 = arith.constant 0 : index
    %c0_46 = arith.constant 0 : index
    %c0_47 = arith.constant 0 : index
    %37 = vector.load %arg4[%c0_45, %c0_46, %c0_47] : memref<3x128x128xf32, #tpu.memory_space<vmem>>, vector<1x128x128xf32>
    %38 = vector.shape_cast %37 : vector<1x128x128xf32> to vector<128x128xf32>
    %cst_48 = arith.constant dense<0.000000e+00> : vector<34x128xf32>
    %39 = tpu.matmul %36, %38, %cst_48 {dimension_numbers = #tpu.dot_dimension_numbers<[1], [0], [0], [1], [0, 0, 1, 1], [], []>} : vector<34x128xf32>, vector<128x128xf32>, vector<34x128xf32> -> vector<34x128xf32>
    %c1_49 = arith.constant 1 : index
    %c0_50 = arith.constant 0 : index
    %40 = vector.load %arg11[%c1_49, %c0_50] : memref<36x128xf32, #tpu.memory_space<vmem>>, vector<34x128xf32>
    %c1_51 = arith.constant 1 : index
    %c0_52 = arith.constant 0 : index
    %c0_53 = arith.constant 0 : index
    %41 = vector.load %arg4[%c1_51, %c0_52, %c0_53] : memref<3x128x128xf32, #tpu.memory_space<vmem>>, vector<1x128x128xf32>
    %42 = vector.shape_cast %41 : vector<1x128x128xf32> to vector<128x128xf32>
    %cst_54 = arith.constant dense<0.000000e+00> : vector<34x128xf32>
    %43 = tpu.matmul %40, %42, %cst_54 {dimension_numbers = #tpu.dot_dimension_numbers<[1], [0], [0], [1], [0, 0, 1, 1], [], []>} : vector<34x128xf32>, vector<128x128xf32>, vector<34x128xf32> -> vector<34x128xf32>
    %44 = arith.addf %39, %43 : vector<34x128xf32>
    %c2_55 = arith.constant 2 : index
    %c0_56 = arith.constant 0 : index
    %45 = vector.load %arg11[%c2_55, %c0_56] : memref<36x128xf32, #tpu.memory_space<vmem>>, vector<34x128xf32>
    %c2_57 = arith.constant 2 : index
    %c0_58 = arith.constant 0 : index
    %c0_59 = arith.constant 0 : index
    %46 = vector.load %arg4[%c2_57, %c0_58, %c0_59] : memref<3x128x128xf32, #tpu.memory_space<vmem>>, vector<1x128x128xf32>
    %47 = vector.shape_cast %46 : vector<1x128x128xf32> to vector<128x128xf32>
    %cst_60 = arith.constant dense<0.000000e+00> : vector<34x128xf32>
    %48 = tpu.matmul %45, %47, %cst_60 {dimension_numbers = #tpu.dot_dimension_numbers<[1], [0], [0], [1], [0, 0, 1, 1], [], []>} : vector<34x128xf32>, vector<128x128xf32>, vector<34x128xf32> -> vector<34x128xf32>
    %49 = arith.addf %44, %48 : vector<34x128xf32>
    %c0_61 = arith.constant 0 : index
    %c0_62 = arith.constant 0 : index
    %50 = vector.load %arg5[%c0_61, %c0_62] : memref<1x128xf32, #tpu.memory_space<vmem>>, vector<1x128xf32>
    %51 = vector.broadcast %50 : vector<1x128xf32> to vector<34x128xf32>
    %52 = arith.addf %49, %51 : vector<34x128xf32>
    %cst_63 = arith.constant 0.000000e+00 : f32
    %53 = vector.broadcast %cst_63 : f32 to vector<34x128xf32>
    %54 = arith.maximumf %52, %53 : vector<34x128xf32>
    %55 = vector.extract_strided_slice %54 {offsets = [0, 0], sizes = [16, 128], strides = [1, 1]} : vector<34x128xf32> to vector<16x128xf32>
    %c0_64 = arith.constant 0 : index
    %c0_65 = arith.constant 0 : index
    %c0_66 = arith.constant 0 : index
    %56 = vector.load %arg8[%c0_64, %c0_65, %c0_66] : memref<2x16x128xf32, #tpu.memory_space<vmem>>, vector<1x16x128xf32>
    %57 = vector.shape_cast %56 : vector<1x16x128xf32> to vector<16x128xf32>
    %58 = vector.shape_cast %55 : vector<16x128xf32> to vector<1x16x128xf32>
    tpu.vector_store %arg8[%c0_64, %c0_65, %c0_66], %58 {strides = array<i32>} : memref<2x16x128xf32, #tpu.memory_space<vmem>>, vector<1x16x128xf32>,
    %59 = vector.extract_strided_slice %54 {offsets = [18, 0], sizes = [16, 128], strides = [1, 1]} : vector<34x128xf32> to vector<16x128xf32>
    %c1_67 = arith.constant 1 : index
    %c0_68 = arith.constant 0 : index
    %c0_69 = arith.constant 0 : index
    %60 = vector.load %arg8[%c1_67, %c0_68, %c0_69] : memref<2x16x128xf32, #tpu.memory_space<vmem>>, vector<1x16x128xf32>
    %61 = vector.shape_cast %60 : vector<1x16x128xf32> to vector<16x128xf32>
    %62 = vector.shape_cast %59 : vector<16x128xf32> to vector<1x16x128xf32>
    tpu.vector_store %arg8[%c1_67, %c0_68, %c0_69], %62 {strides = array<i32>} : memref<2x16x128xf32, #tpu.memory_space<vmem>>, vector<1x16x128xf32>,
    %c0_70 = arith.constant 0 : index
    %c0_71 = arith.constant 0 : index
    %c0_72 = arith.constant 0 : index
    %63 = vector.load %arg6[%c0_70, %c0_71, %c0_72] : memref<4x8x34xf32, #tpu.memory_space<vmem>>, vector<1x8x34xf32>
    %64 = vector.shape_cast %63 : vector<1x8x34xf32> to vector<8x34xf32>
    %cst_73 = arith.constant dense<0.000000e+00> : vector<8x128xf32>
    %65 = tpu.matmul %64, %54, %cst_73 {dimension_numbers = #tpu.dot_dimension_numbers<[1], [0], [0], [1], [0, 0, 1, 1], [], []>} : vector<8x34xf32>, vector<34x128xf32>, vector<8x128xf32> -> vector<8x128xf32>
    %c1_74 = arith.constant 1 : index
    %c0_75 = arith.constant 0 : index
    %c0_76 = arith.constant 0 : index
    %66 = vector.load %arg6[%c1_74, %c0_75, %c0_76] : memref<4x8x34xf32, #tpu.memory_space<vmem>>, vector<1x8x34xf32>
    %67 = vector.shape_cast %66 : vector<1x8x34xf32> to vector<8x34xf32>
    %cst_77 = arith.constant dense<0.000000e+00> : vector<8x128xf32>
    %68 = tpu.matmul %67, %54, %cst_77 {dimension_numbers = #tpu.dot_dimension_numbers<[1], [0], [0], [1], [0, 0, 1, 1], [], []>} : vector<8x34xf32>, vector<34x128xf32>, vector<8x128xf32> -> vector<8x128xf32>
    %69 = arith.maximumf %65, %68 : vector<8x128xf32>
    %c0_78 = arith.constant 0 : index
    %c0_79 = arith.constant 0 : index
    %c0_80 = arith.constant 0 : index
    %70 = vector.load %arg7[%c0_78, %c0_79, %c0_80] : memref<4x128x128xf32, #tpu.memory_space<vmem>>, vector<1x128x128xf32>
    %71 = vector.shape_cast %70 : vector<1x128x128xf32> to vector<128x128xf32>
    %cst_81 = arith.constant dense<0.000000e+00> : vector<8x128xf32>
    %72 = tpu.matmul %69, %71, %cst_81 {dimension_numbers = #tpu.dot_dimension_numbers<[1], [0], [0], [1], [0, 0, 1, 1], [], []>} : vector<8x128xf32>, vector<128x128xf32>, vector<8x128xf32> -> vector<8x128xf32>
    %c1_82 = arith.constant 1 : index
    %c0_83 = arith.constant 0 : index
    %c0_84 = arith.constant 0 : index
    %73 = vector.load %arg7[%c1_82, %c0_83, %c0_84] : memref<4x128x128xf32, #tpu.memory_space<vmem>>, vector<1x128x128xf32>
    %74 = vector.shape_cast %73 : vector<1x128x128xf32> to vector<128x128xf32>
    %cst_85 = arith.constant dense<0.000000e+00> : vector<8x128xf32>
    %75 = tpu.matmul %69, %74, %cst_85 {dimension_numbers = #tpu.dot_dimension_numbers<[1], [0], [0], [1], [0, 0, 1, 1], [], []>} : vector<8x128xf32>, vector<128x128xf32>, vector<8x128xf32> -> vector<8x128xf32>
    %76 = arith.maximumf %72, %75 : vector<8x128xf32>
    %c2_86 = arith.constant 2 : index
    %c0_87 = arith.constant 0 : index
    %c0_88 = arith.constant 0 : index
    %77 = vector.load %arg6[%c2_86, %c0_87, %c0_88] : memref<4x8x34xf32, #tpu.memory_space<vmem>>, vector<1x8x34xf32>
    %78 = vector.shape_cast %77 : vector<1x8x34xf32> to vector<8x34xf32>
    %cst_89 = arith.constant dense<0.000000e+00> : vector<8x128xf32>
    %79 = tpu.matmul %78, %54, %cst_89 {dimension_numbers = #tpu.dot_dimension_numbers<[1], [0], [0], [1], [0, 0, 1, 1], [], []>} : vector<8x34xf32>, vector<34x128xf32>, vector<8x128xf32> -> vector<8x128xf32>
    %c3 = arith.constant 3 : index
    %c0_90 = arith.constant 0 : index
    %c0_91 = arith.constant 0 : index
    %80 = vector.load %arg6[%c3, %c0_90, %c0_91] : memref<4x8x34xf32, #tpu.memory_space<vmem>>, vector<1x8x34xf32>
    %81 = vector.shape_cast %80 : vector<1x8x34xf32> to vector<8x34xf32>
    %cst_92 = arith.constant dense<0.000000e+00> : vector<8x128xf32>
    %82 = tpu.matmul %81, %54, %cst_92 {dimension_numbers = #tpu.dot_dimension_numbers<[1], [0], [0], [1], [0, 0, 1, 1], [], []>} : vector<8x34xf32>, vector<34x128xf32>, vector<8x128xf32> -> vector<8x128xf32>
    %83 = arith.maximumf %79, %82 : vector<8x128xf32>
    %c2_93 = arith.constant 2 : index
    %c0_94 = arith.constant 0 : index
    %c0_95 = arith.constant 0 : index
    %84 = vector.load %arg7[%c2_93, %c0_94, %c0_95] : memref<4x128x128xf32, #tpu.memory_space<vmem>>, vector<1x128x128xf32>
    %85 = vector.shape_cast %84 : vector<1x128x128xf32> to vector<128x128xf32>
    %cst_96 = arith.constant dense<0.000000e+00> : vector<8x128xf32>
    %86 = tpu.matmul %83, %85, %cst_96 {dimension_numbers = #tpu.dot_dimension_numbers<[1], [0], [0], [1], [0, 0, 1, 1], [], []>} : vector<8x128xf32>, vector<128x128xf32>, vector<8x128xf32> -> vector<8x128xf32>
    %c3_97 = arith.constant 3 : index
    %c0_98 = arith.constant 0 : index
    %c0_99 = arith.constant 0 : index
    %87 = vector.load %arg7[%c3_97, %c0_98, %c0_99] : memref<4x128x128xf32, #tpu.memory_space<vmem>>, vector<1x128x128xf32>
    %88 = vector.shape_cast %87 : vector<1x128x128xf32> to vector<128x128xf32>
    %cst_100 = arith.constant dense<0.000000e+00> : vector<8x128xf32>
    %89 = tpu.matmul %83, %88, %cst_100 {dimension_numbers = #tpu.dot_dimension_numbers<[1], [0], [0], [1], [0, 0, 1, 1], [], []>} : vector<8x128xf32>, vector<128x128xf32>, vector<8x128xf32> -> vector<8x128xf32>
    %90 = arith.maximumf %86, %89 : vector<8x128xf32>
    %91 = arith.addf %76, %90 : vector<8x128xf32>
    %c0_101 = arith.constant 0 : index
    %c0_102 = arith.constant 0 : index
    %c0_103 = arith.constant 0 : index
    %92 = vector.load %arg9[%c0_101, %c0_102, %c0_103] : memref<1x8x128xf32, #tpu.memory_space<vmem>>, vector<1x8x128xf32>
    %93 = vector.shape_cast %92 : vector<1x8x128xf32> to vector<8x128xf32>
    %94 = vector.shape_cast %91 : vector<8x128xf32> to vector<1x8x128xf32>
    tpu.vector_store %arg9[%c0_101, %c0_102, %c0_103], %94 {strides = array<i32>} : memref<1x8x128xf32, #tpu.memory_space<vmem>>, vector<1x8x128xf32>,
    return
  }
  func.func @transform_0(%arg0: i32) -> (i32, i32, i32) {
    %c0_i32 = arith.constant 0 : i32
    %c0_i32_0 = arith.constant 0 : i32
    %c0_i32_1 = arith.constant 0 : i32
    return %arg0, %c0_i32, %c0_i32_0 : i32, i32, i32
  }
  func.func @transform_1(%arg0: i32) -> (i32, i32, i32) {
    %c0_i32 = arith.constant 0 : i32
    %c0_i32_0 = arith.constant 0 : i32
    %c0_i32_1 = arith.constant 0 : i32
    %c0_i32_2 = arith.constant 0 : i32
    return %c0_i32, %c0_i32_0, %c0_i32_1 : i32, i32, i32
  }
  func.func @transform_2(%arg0: i32) -> (i32, i32) {
    %c0_i32 = arith.constant 0 : i32
    %c0_i32_0 = arith.constant 0 : i32
    %c0_i32_1 = arith.constant 0 : i32
    return %c0_i32, %c0_i32_0 : i32, i32
  }
  func.func @transform_3(%arg0: i32) -> (i32, i32, i32) {
    %c0_i32 = arith.constant 0 : i32
    %c0_i32_0 = arith.constant 0 : i32
    %c0_i32_1 = arith.constant 0 : i32
    %c0_i32_2 = arith.constant 0 : i32
    return %c0_i32, %c0_i32_0, %c0_i32_1 : i32, i32, i32
  }
  func.func @transform_4(%arg0: i32) -> (i32, i32) {
    %c0_i32 = arith.constant 0 : i32
    %c0_i32_0 = arith.constant 0 : i32
    %c0_i32_1 = arith.constant 0 : i32
    return %c0_i32, %c0_i32_0 : i32, i32
  }
  func.func @transform_5(%arg0: i32) -> (i32, i32, i32) {
    %c0_i32 = arith.constant 0 : i32
    %c0_i32_0 = arith.constant 0 : i32
    %c0_i32_1 = arith.constant 0 : i32
    %c0_i32_2 = arith.constant 0 : i32
    return %c0_i32, %c0_i32_0, %c0_i32_1 : i32, i32, i32
  }
  func.func @transform_6(%arg0: i32) -> (i32, i32, i32) {
    %c0_i32 = arith.constant 0 : i32
    %c0_i32_0 = arith.constant 0 : i32
    %c0_i32_1 = arith.constant 0 : i32
    %c0_i32_2 = arith.constant 0 : i32
    return %c0_i32, %c0_i32_0, %c0_i32_1 : i32, i32, i32
  }
  func.func @transform_7(%arg0: i32) -> (i32, i32, i32) {
    %c0_i32 = arith.constant 0 : i32
    %c0_i32_0 = arith.constant 0 : i32
    %c0_i32_1 = arith.constant 0 : i32
    return %arg0, %c0_i32, %c0_i32_0 : i32, i32, i32
  }
  func.func @transform_8(%arg0: i32) -> (i32, i32, i32) {
    %c0_i32 = arith.constant 0 : i32
    %c0_i32_0 = arith.constant 0 : i32
    %c0_i32_1 = arith.constant 0 : i32
    return %arg0, %c0_i32, %c0_i32_0 : i32, i32, i32
  }
}

</mosaic_0001>

<llo_original>
// kernel: forward.1
$region0: #{forward.1}
  #allocation0 [shape = 'u32[]', space=smem, size = 0x4, offset = 0x4, fixed_abs, tag = 'smem constant byte address 0x4 - core index']
  #allocation1 [shape = 'u32[144,128]{1,0:T(1,128)}', space=vmem, size = 0x12000, scoped, tag = 'internal scratch']
  #allocation2 [shape = 'f32[36,64]{1,0:T(8,128)}', space=vmem, size = 0x5000, scoped, tag = 'scratch operand']
  #allocation3 [shape = 'f32[36,128]{1,0:T(8,128)}', space=vmem, size = 0x5000, scoped, tag = 'scratch operand']
  %s0 = inlined_call_operand.vmem [shape: f32[2,16,64], index: 0, kind: input, shape index: {}]
  %s1 = inlined_call_operand.hbm [shape: f32[3,64,128], index: 1, kind: input, shape index: {}]
  %s2 = inlined_call_operand.vmem [shape: f32[1,128], index: 2, kind: input, shape index: {}]
  %s3 = inlined_call_operand.vmem [shape: f32[3,128,128], index: 3, kind: input, shape index: {}]
  %s4 = inlined_call_operand.vmem [shape: f32[1,128], index: 4, kind: input, shape index: {}]
  %s5 = inlined_call_operand.vmem [shape: f32[4,8,34], index: 5, kind: input, shape index: {}]
  %s6 = inlined_call_operand.hbm [shape: f32[4,128,128], index: 6, kind: input, shape index: {}]
  %s7 = inlined_call_operand.vmem [shape: f32[2,16,128], index: 7, kind: output, shape index: {0}]
  %s8 = inlined_call_operand.vmem [shape: f32[1,8,128], index: 8, kind: output, shape index: {1}]
  %9 = xla_tuple %s7, %s8
  %s10 = sld [smem:[#allocation0]]
  $region54: #{forward.1} parent=0
    _
  %s12 = ssub.s32 1, %s10
  %s13 = scalar_select 0, %s12, %s10
  $region1: #{forward.1} parent=0
    #allocation4 [shape = 'u8[98304]{0}', space=vmem, size = 0x18000, scoped, tag = 'input window, operand 1, single buffered']
    #allocation5 [shape = 's32[1]{0}', space=sflag, size = 0x4, scoped, tag = 'scoped memory for forward.1']
    #allocation6 [shape = 'u8[262144]{0}', space=vmem, size = 0x40000, scoped, tag = 'input window, operand 6, single buffered']
    #allocation7 [shape = 's32[1]{0}', space=sflag, size = 0x4, scoped, tag = 'scoped memory for forward.1']
    %14 = vsyncpa [#allocation5], 0
    %15 = vsyncpa [#allocation7], 0
    // Predicated region
    $region2: #{forward.1} parent=1 // pred_check
      _
    $region3: #{forward.1} parent=1 // pred_check_branch
      %17 = sbr.rel (0) target = $region5
    $region4: #{forward.1} parent=1 // pred_region
      _
    $region5: #{forward.1} parent=1 // pred_fallthru
      _
    // Predicated region
    $region6: #{forward.1} parent=1 // pred_check
      _
    $region7: #{forward.1} parent=1 // pred_check_branch
      %19 = sbr.rel (0) target = $region9
    $region8: #{forward.1} parent=1 // pred_region
      %s21 = ssub.s32 3072, 3072
      %22 = vsyncadd [#allocation5], %s21
      %s23 = sshll.u32 [#allocation4], 4
      %s24 = int_to_ptr.vmem [resolvable:$true] %s23
      %29 = dma.hbm_to_vmem [thread:$0]  %s1, 3072, %s24, [#allocation5], 128, 128, 8
    $region9: #{forward.1} parent=1 // pred_fallthru
      _
    // Predicated region
    $region10: #{forward.1} parent=1 // pred_check
      _
    $region11: #{forward.1} parent=1 // pred_check_branch
      %31 = sbr.rel (0) target = $region13
    $region12: #{forward.1} parent=1 // pred_region
      _
    $region13: #{forward.1} parent=1 // pred_fallthru
      _
    // Predicated region
    $region14: #{forward.1} parent=1 // pred_check
      _
    $region15: #{forward.1} parent=1 // pred_check_branch
      %33 = sbr.rel (0) target = $region17
    $region16: #{forward.1} parent=1 // pred_region
      _
    $region17: #{forward.1} parent=1 // pred_fallthru
      _
    // Predicated region
    $region18: #{forward.1} parent=1 // pred_check
      _
    $region19: #{forward.1} parent=1 // pred_check_branch
      %35 = sbr.rel (0) target = $region21
    $region20: #{forward.1} parent=1 // pred_region
      _
    $region21: #{forward.1} parent=1 // pred_fallthru
      _
    // Predicated region
    $region22: #{forward.1} parent=1 // pred_check
      _
    $region23: #{forward.1} parent=1 // pred_check_branch
      %37 = sbr.rel (0) target = $region25
    $region24: #{forward.1} parent=1 // pred_region
      _
    $region25: #{forward.1} parent=1 // pred_fallthru
      _
    // Predicated region
    $region26: #{forward.1} parent=1 // pred_check
      _
    $region27: #{forward.1} parent=1 // pred_check_branch
      %39 = sbr.rel (0) target = $region29
    $region28: #{forward.1} parent=1 // pred_region
      %s41 = ssub.s32 8192, 8192
      %42 = vsyncadd [#allocation7], %s41
      %s43 = sshll.u32 [#allocation6], 4
      %s44 = int_to_ptr.vmem [resolvable:$true] %s43
      %49 = dma.hbm_to_vmem [thread:$0]  %s6, 8192, %s44, [#allocation7], 128, 128, 8
    $region29: #{forward.1} parent=1 // pred_fallthru
      _
    // Predicated region
    $region30: #{forward.1} parent=1 // pred_check
      _
    $region31: #{forward.1} parent=1 // pred_check_branch
      %51 = sbr.rel (0) target = $region33
    $region32: #{forward.1} parent=1 // pred_region
      %52 = dma.done [#allocation5], 3072
    $region33: #{forward.1} parent=1 // pred_fallthru
      _
    // Predicated region
    $region34: #{forward.1} parent=1 // pred_check
      _
    $region35: #{forward.1} parent=1 // pred_check_branch
      %54 = sbr.rel (0) target = $region37
    $region36: #{forward.1} parent=1 // pred_region
      %55 = dma.done [#allocation7], 8192
    $region37: #{forward.1} parent=1 // pred_fallthru
      _
    %vm56 = vcmask 516096
    %57 = vst.msk [vmem:[#allocation2] sm:$0x1] %vm56, 0.0
    %58 = vst.msk [vmem:[#allocation2 + $0x11] sm:$0x1] %vm56, 0.0
    %v59 = vld [vmem:[%s0] sm:$0xff]
    %v60 = vld [vmem:[%s0 + $0x8] sm:$0xff]
    %vm61 = vcmask 523264
    %62 = vst.msk [vmem:[#allocation2 + $0x1] sm:$0xff] %vm61, %v59
    %63 = vst.msk [vmem:[#allocation2 + $0x9] sm:$0xff] %vm61, %v60
    %64 = vst.msk [vmem:[#allocation2 + $0x12] sm:$0x1] %vm56, 0.0
    %65 = vst.msk [vmem:[#allocation2 + $0x23] sm:$0x1] %vm56, 0.0
    %s66 = scalar_lea.vmem %s0, 16
    %v67 = vld [vmem:[%s66] sm:$0xff]
    %v68 = vld [vmem:[%s66 + $0x8] sm:$0xff]
    %69 = vst.msk [vmem:[#allocation2 + $0x13] sm:$0xff] %vm61, %v67
    %70 = vst.msk [vmem:[#allocation2 + $0x1b] sm:$0xff] %vm61, %v68
    %v71 = vld [vmem:[#allocation2] sm:$0xff]
    %v72 = vld [vmem:[#allocation2 + $0x8] sm:$0xff]
    %v73 = vld [vmem:[#allocation2 + $0x10] sm:$0xff]
    %v74 = vld [vmem:[#allocation2 + $0x18] sm:$0xff]
    %v75 = vld [vmem:[#allocation2 + $0x20] sm:$0x3]
    %v76 = vld [vmem:[#allocation4] sm:$0xff]
    %v77 = vld [vmem:[#allocation4 + $0x8] sm:$0xff]
    %v78 = vld [vmem:[#allocation4 + $0x10] sm:$0xff]
    %v79 = vld [vmem:[#allocation4 + $0x18] sm:$0xff]
    %v80 = vld [vmem:[#allocation4 + $0x20] sm:$0xff]
    %v81 = vld [vmem:[#allocation4 + $0x28] sm:$0xff]
    %v82 = vld [vmem:[#allocation4 + $0x30] sm:$0xff]
    %v83 = vld [vmem:[#allocation4 + $0x38] sm:$0xff]
    %v84 = vld [vmem:[#allocation2 + $0x1] sm:$0xff]
    %v85 = vld [vmem:[#allocation2 + $0x9] sm:$0xff]
    %v86 = vld [vmem:[#allocation2 + $0x11] sm:$0xff]
    %v87 = vld [vmem:[#allocation2 + $0x19] sm:$0xff]
    %v88 = vld [vmem:[#allocation2 + $0x21] sm:$0x3]
    %s89 = scalar_lea.vmem [#allocation4], 64
    %v90 = vld [vmem:[%s89] sm:$0xff]
    %v91 = vld [vmem:[%s89 + $0x8] sm:$0xff]
    %v92 = vld [vmem:[%s89 + $0x10] sm:$0xff]
    %v93 = vld [vmem:[%s89 + $0x18] sm:$0xff]
    %v94 = vld [vmem:[%s89 + $0x20] sm:$0xff]
    %v95 = vld [vmem:[%s89 + $0x28] sm:$0xff]
    %v96 = vld [vmem:[%s89 + $0x30] sm:$0xff]
    %v97 = vld [vmem:[%s89 + $0x38] sm:$0xff]
    %v99 = vsel %vm61, %v84, 0
    %v102 = vsel %vm61, %v85, 0
    %v105 = vsel %vm61, %v86, 0
    %v108 = vsel %vm61, %v87, 0
    %v111 = vsel %vm61, %v88, 0
    %113 = vmatprep.subr.mxu0 0.0
    %114 = vmatpush1.msra.mxu0 0.0
    %115 = vmatprep.subr.mxu0 0.0
    %116 = vmatpush1.msra.mxu0 0.0
    %117 = vmatprep.subr.mxu0 0.0
    %118 = vmatpush1.msra.mxu0 0.0
    %119 = vmatprep.subr.mxu0 0.0
    %120 = vmatpush1.msra.mxu0 0.0
    %121 = vmatprep.subr.mxu0 0.0
    %122 = vmatpush1.msra.mxu0 0.0
    %123 = vmatprep.subr.mxu0 0.0
    %124 = vmatpush1.msra.mxu0 0.0
    %125 = vmatprep.subr.mxu0 0.0
    %126 = vmatpush1.msra.mxu0 0.0
    %127 = vmatprep.subr.mxu0 0.0
    %128 = vmatpush1.msra.mxu0 0.0
    %129 = vmatprep.subr.mxu0 0.0
    %130 = vmatpush1.msra.mxu0 %v97
    %131 = vmatprep.subr.mxu0 0.0
    %132 = vmatpush1.msra.mxu0 %v96
    %133 = vmatprep.subr.mxu0 0.0
    %134 = vmatpush1.msra.mxu0 %v95
    %135 = vmatprep.subr.mxu0 0.0
    %136 = vmatpush1.msra.mxu0 %v94
    %137 = vmatprep.subr.mxu0 0.0
    %138 = vmatpush1.msra.mxu0 %v93
    %139 = vmatprep.subr.mxu0 0.0
    %140 = vmatpush1.msra.mxu0 %v92
    %141 = vmatprep.subr.mxu0 0.0
    %142 = vmatpush1.msra.mxu0 %v91
    %143 = vmatprep.subr.mxu0 0.0
    %144 = vmatpush1.msra.mxu0 %v90
    %145 = vmatprep.subr.mxu0 0.0
    %146 = vmatpush2.msra.mxu0 0.0
    %147 = vmatprep.subr.mxu0 0.0
    %148 = vmatpush2.msra.mxu0 0.0
    %149 = vmatprep.subr.mxu0 0.0
    %150 = vmatpush2.msra.mxu0 0.0
    %151 = vmatprep.subr.mxu0 0.0
    %152 = vmatpush2.msra.mxu0 0.0
    %153 = vmatprep.subr.mxu0 0.0
    %154 = vmatpush2.msra.mxu0 0.0
    %155 = vmatprep.subr.mxu0 0.0
    %156 = vmatpush2.msra.mxu0 0.0
    %157 = vmatprep.subr.mxu0 0.0
    %158 = vmatpush2.msra.mxu0 0.0
    %159 = vmatprep.subr.mxu0 0.0
    %160 = vmatpush2.msra.mxu0 0.0
    %161 = vmatprep.subr.mxu0 0.0
    %162 = vmatpush2.msra.mxu0 0.0
    %163 = vmatprep.subr.mxu0 0.0
    %164 = vmatpush2.msra.mxu0 0.0
    %165 = vmatprep.subr.mxu0 0.0
    %166 = vmatpush2.msra.mxu0 0.0
    %167 = vmatprep.subr.mxu0 0.0
    %168 = vmatpush2.msra.mxu0 0.0
    %169 = vmatprep.subr.mxu0 0.0
    %170 = vmatpush2.msra.mxu0 0.0
    %171 = vmatprep.subr.mxu0 0.0
    %172 = vmatpush2.msra.mxu0 0.0
    %173 = vmatprep.subr.mxu0 0.0
    %174 = vmatpush2.msra.mxu0 0.0
    %175 = vmatprep.subr.mxu0 0.0
    %176 = vmatpush2.msra.mxu0 0.0
    %177 = vmatprep.mubr.f32.mxu0 0.0
    %178 = vmatmul.mubr.f32.gmra.mxu0 %v99
    %v179 = vpop.f32.mrf.mxu0
    %v180 = vadd.f32 0.0, %v179
    %v181 = vpop.f32.mrf.mxu0
    %182 = vmatprep.mubr.f32.mxu0 0.0
    %183 = vmatmul.mubr.f32.gmra.mxu0 %v102
    %v184 = vpop.f32.mrf.mxu0
    %v185 = vadd.f32 0.0, %v184
    %v186 = vpop.f32.mrf.mxu0
    %187 = vmatprep.mubr.f32.mxu0 0.0
    %188 = vmatmul.mubr.f32.gmra.mxu0 %v105
    %v189 = vpop.f32.mrf.mxu0
    %v190 = vadd.f32 0.0, %v189
    %v191 = vpop.f32.mrf.mxu0
    %192 = vmatprep.mubr.f32.mxu0 0.0
    %193 = vmatmul.mubr.f32.gmra.mxu0 %v108
    %v194 = vpop.f32.mrf.mxu0
    %v195 = vadd.f32 0.0, %v194
    %v196 = vpop.f32.mrf.mxu0
    %197 = vmatprep.mubr.f32.mxu0 0.0
    %198 = vmatmul.mubr.f32.gmra.mxu0 %v111
    %v199 = vpop.f32.mrf.mxu0
    %v200 = vadd.f32 0.0, %v199
    %v201 = vpop.f32.mrf.mxu0
    %202 = vdwg.mxu0
    %v204 = vsel %vm61, %v71, 0
    %v207 = vsel %vm61, %v72, 0
    %v210 = vsel %vm61, %v73, 0
    %v213 = vsel %vm61, %v74, 0
    %v216 = vsel %vm61, %v75, 0
    %218 = vmatprep.subr.mxu0 0.0
    %219 = vmatpush1.msra.mxu0 0.0
    %220 = vmatprep.subr.mxu0 0.0
    %221 = vmatpush1.msra.mxu0 0.0
    %222 = vmatprep.subr.mxu0 0.0
    %223 = vmatpush1.msra.mxu0 0.0
    %224 = vmatprep.subr.mxu0 0.0
    %225 = vmatpush1.msra.mxu0 0.0
    %226 = vmatprep.subr.mxu0 0.0
    %227 = vmatpush1.msra.mxu0 0.0
    %228 = vmatprep.subr.mxu0 0.0
    %229 = vmatpush1.msra.mxu0 0.0
    %230 = vmatprep.subr.mxu0 0.0
    %231 = vmatpush1.msra.mxu0 0.0
    %232 = vmatprep.subr.mxu0 0.0
    %233 = vmatpush1.msra.mxu0 0.0
    %234 = vmatprep.subr.mxu0 0.0
    %235 = vmatpush1.msra.mxu0 %v83
    %236 = vmatprep.subr.mxu0 0.0
    %237 = vmatpush1.msra.mxu0 %v82
    %238 = vmatprep.subr.mxu0 0.0
    %239 = vmatpush1.msra.mxu0 %v81
    %240 = vmatprep.subr.mxu0 0.0
    %241 = vmatpush1.msra.mxu0 %v80
    %242 = vmatprep.subr.mxu0 0.0
    %243 = vmatpush1.msra.mxu0 %v79
    %244 = vmatprep.subr.mxu0 0.0
    %245 = vmatpush1.msra.mxu0 %v78
    %246 = vmatprep.subr.mxu0 0.0
    %247 = vmatpush1.msra.mxu0 %v77
    %248 = vmatprep.subr.mxu0 0.0
    %249 = vmatpush1.msra.mxu0 %v76
    %250 = vmatprep.subr.mxu0 0.0
    %251 = vmatpush2.msra.mxu0 0.0
    %252 = vmatprep.subr.mxu0 0.0
    %253 = vmatpush2.msra.mxu0 0.0
    %254 = vmatprep.subr.mxu0 0.0
    %255 = vmatpush2.msra.mxu0 0.0
    %256 = vmatprep.subr.mxu0 0.0
    %257 = vmatpush2.msra.mxu0 0.0
    %258 = vmatprep.subr.mxu0 0.0
    %259 = vmatpush2.msra.mxu0 0.0
    %260 = vmatprep.subr.mxu0 0.0
    %261 = vmatpush2.msra.mxu0 0.0
    %262 = vmatprep.subr.mxu0 0.0
    %263 = vmatpush2.msra.mxu0 0.0
    %264 = vmatprep.subr.mxu0 0.0
    %265 = vmatpush2.msra.mxu0 0.0
    %266 = vmatprep.subr.mxu0 0.0
    %267 = vmatpush2.msra.mxu0 0.0
    %268 = vmatprep.subr.mxu0 0.0
    %269 = vmatpush2.msra.mxu0 0.0
    %270 = vmatprep.subr.mxu0 0.0
    %271 = vmatpush2.msra.mxu0 0.0
    %272 = vmatprep.subr.mxu0 0.0
    %273 = vmatpush2.msra.mxu0 0.0
    %274 = vmatprep.subr.mxu0 0.0
    %275 = vmatpush2.msra.mxu0 0.0
    %276 = vmatprep.subr.mxu0 0.0
    %277 = vmatpush2.msra.mxu0 0.0
    %278 = vmatprep.subr.mxu0 0.0
    %279 = vmatpush2.msra.mxu0 0.0
    %280 = vmatprep.subr.mxu0 0.0
    %281 = vmatpush2.msra.mxu0 0.0
    %282 = vmatprep.mubr.f32.mxu0 0.0
    %283 = vmatmul.mubr.f32.gmra.mxu0 %v204
    %v284 = vpop.f32.mrf.mxu0
    %v285 = vadd.f32 %v180, %v284
    %v286 = vpop.f32.mrf.mxu0
    %287 = vmatprep.mubr.f32.mxu0 0.0
    %288 = vmatmul.mubr.f32.gmra.mxu0 %v207
    %v289 = vpop.f32.mrf.mxu0
    %v290 = vadd.f32 %v185, %v289
    %v291 = vpop.f32.mrf.mxu0
    %292 = vmatprep.mubr.f32.mxu0 0.0
    %293 = vmatmul.mubr.f32.gmra.mxu0 %v210
    %v294 = vpop.f32.mrf.mxu0
    %v295 = vadd.f32 %v190, %v294
    %v296 = vpop.f32.mrf.mxu0
    %297 = vmatprep.mubr.f32.mxu0 0.0
    %298 = vmatmul.mubr.f32.gmra.mxu0 %v213
    %v299 = vpop.f32.mrf.mxu0
    %v300 = vadd.f32 %v195, %v299
    %v301 = vpop.f32.mrf.mxu0
    %302 = vmatprep.mubr.f32.mxu0 0.0
    %303 = vmatmul.mubr.f32.gmra.mxu0 %v216
    %v304 = vpop.f32.mrf.mxu0
    %v305 = vadd.f32 %v200, %v304
    %v306 = vpop.f32.mrf.mxu0
    %307 = vdwg.mxu0
    %v308 = vld [vmem:[#allocation2 + $0x2] sm:$0xff]
    %v309 = vld [vmem:[#allocation2 + $0xa] sm:$0xff]
    %v310 = vld [vmem:[#allocation2 + $0x12] sm:$0xff]
    %v311 = vld [vmem:[#allocation2 + $0x1a] sm:$0xff]
    %v312 = vld [vmem:[#allocation2 + $0x22] sm:$0x3]
    %s313 = scalar_lea.vmem [#allocation4], 128
    %v314 = vld [vmem:[%s313] sm:$0xff]
    %v315 = vld [vmem:[%s313 + $0x8] sm:$0xff]
    %v316 = vld [vmem:[%s313 + $0x10] sm:$0xff]
    %v317 = vld [vmem:[%s313 + $0x18] sm:$0xff]
    %v318 = vld [vmem:[%s313 + $0x20] sm:$0xff]
    %v319 = vld [vmem:[%s313 + $0x28] sm:$0xff]
    %v320 = vld [vmem:[%s313 + $0x30] sm:$0xff]
    %v321 = vld [vmem:[%s313 + $0x38] sm:$0xff]
    %v323 = vsel %vm61, %v308, 0
    %v326 = vsel %vm61, %v309, 0
    %v329 = vsel %vm61, %v310, 0
    %v332 = vsel %vm61, %v311, 0
    %v335 = vsel %vm61, %v312, 0
    %337 = vmatprep.subr.mxu0 0.0
    %338 = vmatpush1.msra.mxu0 0.0
    %339 = vmatprep.subr.mxu0 0.0
    %340 = vmatpush1.msra.mxu0 0.0
    %341 = vmatprep.subr.mxu0 0.0
    %342 = vmatpush1.msra.mxu0 0.0
    %343 = vmatprep.subr.mxu0 0.0
    %344 = vmatpush1.msra.mxu0 0.0
    %345 = vmatprep.subr.mxu0 0.0
    %346 = vmatpush1.msra.mxu0 0.0
    %347 = vmatprep.subr.mxu0 0.0
    %348 = vmatpush1.msra.mxu0 0.0
    %349 = vmatprep.subr.mxu0 0.0
    %350 = vmatpush1.msra.mxu0 0.0
    %351 = vmatprep.subr.mxu0 0.0
    %352 = vmatpush1.msra.mxu0 0.0
    %353 = vmatprep.subr.mxu0 0.0
    %354 = vmatpush1.msra.mxu0 %v321
    %355 = vmatprep.subr.mxu0 0.0
    %356 = vmatpush1.msra.mxu0 %v320
    %357 = vmatprep.subr.mxu0 0.0
    %358 = vmatpush1.msra.mxu0 %v319
    %359 = vmatprep.subr.mxu0 0.0
    %360 = vmatpush1.msra.mxu0 %v318
    %361 = vmatprep.subr.mxu0 0.0
    %362 = vmatpush1.msra.mxu0 %v317
    %363 = vmatprep.subr.mxu0 0.0
    %364 = vmatpush1.msra.mxu0 %v316
    %365 = vmatprep.subr.mxu0 0.0
    %366 = vmatpush1.msra.mxu0 %v315
    %367 = vmatprep.subr.mxu0 0.0
    %368 = vmatpush1.msra.mxu0 %v314
    %369 = vmatprep.subr.mxu0 0.0
    %370 = vmatpush2.msra.mxu0 0.0
    %371 = vmatprep.subr.mxu0 0.0
    %372 = vmatpush2.msra.mxu0 0.0
    %373 = vmatprep.subr.mxu0 0.0
    %374 = vmatpush2.msra.mxu0 0.0
    %375 = vmatprep.subr.mxu0 0.0
    %376 = vmatpush2.msra.mxu0 0.0
    %377 = vmatprep.subr.mxu0 0.0
    %378 = vmatpush2.msra.mxu0 0.0
    %379 = vmatprep.subr.mxu0 0.0
    %380 = vmatpush2.msra.mxu0 0.0
    %381 = vmatprep.subr.mxu0 0.0
    %382 = vmatpush2.msra.mxu0 0.0
    %383 = vmatprep.subr.mxu0 0.0
    %384 = vmatpush2.msra.mxu0 0.0
    %385 = vmatprep.subr.mxu0 0.0
    %386 = vmatpush2.msra.mxu0 0.0
    %387 = vmatprep.subr.mxu0 0.0
    %388 = vmatpush2.msra.mxu0 0.0
    %389 = vmatprep.subr.mxu0 0.0
    %390 = vmatpush2.msra.mxu0 0.0
    %391 = vmatprep.subr.mxu0 0.0
    %392 = vmatpush2.msra.mxu0 0.0
    %393 = vmatprep.subr.mxu0 0.0
    %394 = vmatpush2.msra.mxu0 0.0
    %395 = vmatprep.subr.mxu0 0.0
    %396 = vmatpush2.msra.mxu0 0.0
    %397 = vmatprep.subr.mxu0 0.0
    %398 = vmatpush2.msra.mxu0 0.0
    %399 = vmatprep.subr.mxu0 0.0
    %400 = vmatpush2.msra.mxu0 0.0
    %401 = vmatprep.mubr.f32.mxu0 0.0
    %402 = vmatmul.mubr.f32.gmra.mxu0 %v323
    %v403 = vpop.f32.mrf.mxu0
    %v404 = vadd.f32 0.0, %v403
    %v405 = vpop.f32.mrf.mxu0
    %406 = vmatprep.mubr.f32.mxu0 0.0
    %407 = vmatmul.mubr.f32.gmra.mxu0 %v326
    %v408 = vpop.f32.mrf.mxu0
    %v409 = vadd.f32 0.0, %v408
    %v410 = vpop.f32.mrf.mxu0
    %411 = vmatprep.mubr.f32.mxu0 0.0
    %412 = vmatmul.mubr.f32.gmra.mxu0 %v329
    %v413 = vpop.f32.mrf.mxu0
    %v414 = vadd.f32 0.0, %v413
    %v415 = vpop.f32.mrf.mxu0
    %416 = vmatprep.mubr.f32.mxu0 0.0
    %417 = vmatmul.mubr.f32.gmra.mxu0 %v332
    %v418 = vpop.f32.mrf.mxu0
    %v419 = vadd.f32 0.0, %v418
    %v420 = vpop.f32.mrf.mxu0
    %421 = vmatprep.mubr.f32.mxu0 0.0
    %422 = vmatmul.mubr.f32.gmra.mxu0 %v335
    %v423 = vpop.f32.mrf.mxu0
    %v424 = vadd.f32 0.0, %v423
    %v425 = vpop.f32.mrf.mxu0
    %426 = vdwg.mxu0
    %v427 = vadd.f32 %v285, %v404
    %v428 = vadd.f32 %v290, %v409
    %v429 = vadd.f32 %v295, %v414
    %v430 = vadd.f32 %v300, %v419
    %v431 = vadd.f32 %v305, %v424
    %v432 = vld [vmem:[%s2] sm:$0x1]
    %v434 = vlaneseq
    %v435 = vshrl.u32 %v434, 7
    %v436 = vsub.s32 0, %v435
    %v437 = vrot.slane %v432, %v436
    %v439 = vadd.f32 %v427, %v437
    %v440 = vadd.f32 %v428, %v437
    %v441 = vadd.f32 %v429, %v437
    %v442 = vadd.f32 %v430, %v437
    %v443 = vadd.f32 %v431, %v437
    %v444 = vmax.f32 %v439, 0.0
    %v445 = vmax.f32 %v440, 0.0
    %v446 = vmax.f32 %v441, 0.0
    %v447 = vmax.f32 %v442, 0.0
    %v448 = vmax.f32 %v443, 0.0
    %449 = vst [vmem:[#allocation3 + $0x1] sm:$0xff] %v444
    %450 = vst [vmem:[#allocation3 + $0x9] sm:$0xff] %v445
    %451 = vst [vmem:[#allocation3 + $0x11] sm:$0xff] %v446
    %452 = vst [vmem:[#allocation3 + $0x19] sm:$0xff] %v447
    %453 = vst [vmem:[#allocation3 + $0x21] sm:$0x3] %v448
    %454 = vst [vmem:[#allocation3] sm:$0x1] 0.0
    %455 = vst [vmem:[#allocation3 + $0x11] sm:$0x1] 0.0
    %456 = vst [vmem:[#allocation3 + $0x12] sm:$0x1] 0.0
    %457 = vst [vmem:[#allocation3 + $0x23] sm:$0x1] 0.0
    %v458 = vld [vmem:[#allocation3] sm:$0xff]
    %v459 = vld [vmem:[#allocation3 + $0x8] sm:$0xff]
    %v460 = vld [vmem:[#allocation3 + $0x10] sm:$0xff]
    %v461 = vld [vmem:[#allocation3 + $0x18] sm:$0xff]
    %v462 = vld [vmem:[#allocation3 + $0x20] sm:$0x3]
    %v463 = vld [vmem:[%s3] sm:$0xff]
    %v464 = vld [vmem:[%s3 + $0x8] sm:$0xff]
    %v465 = vld [vmem:[%s3 + $0x10] sm:$0xff]
    %v466 = vld [vmem:[%s3 + $0x18] sm:$0xff]
    %v467 = vld [vmem:[%s3 + $0x20] sm:$0xff]
    %v468 = vld [vmem:[%s3 + $0x28] sm:$0xff]
    %v469 = vld [vmem:[%s3 + $0x30] sm:$0xff]
    %v470 = vld [vmem:[%s3 + $0x38] sm:$0xff]
    %v471 = vld [vmem:[%s3 + $0x40] sm:$0xff]
    %v472 = vld [vmem:[%s3 + $0x48] sm:$0xff]
    %v473 = vld [vmem:[%s3 + $0x50] sm:$0xff]
    %v474 = vld [vmem:[%s3 + $0x58] sm:$0xff]
    %v475 = vld [vmem:[%s3 + $0x60] sm:$0xff]
    %v476 = vld [vmem:[%s3 + $0x68] sm:$0xff]
    %v477 = vld [vmem:[%s3 + $0x70] sm:$0xff]
    %v478 = vld [vmem:[%s3 + $0x78] sm:$0xff]
    %v479 = vld [vmem:[#allocation3 + $0x1] sm:$0xff]
    %v480 = vld [vmem:[#allocation3 + $0x9] sm:$0xff]
    %v481 = vld [vmem:[#allocation3 + $0x11] sm:$0xff]
    %v482 = vld [vmem:[#allocation3 + $0x19] sm:$0xff]
    %v483 = vld [vmem:[#allocation3 + $0x21] sm:$0x3]
    %s484 = scalar_lea.vmem %s3, 128
    %v485 = vld [vmem:[%s484] sm:$0xff]
    %v486 = vld [vmem:[%s484 + $0x8] sm:$0xff]
    %v487 = vld [vmem:[%s484 + $0x10] sm:$0xff]
    %v488 = vld [vmem:[%s484 + $0x18] sm:$0xff]
    %v489 = vld [vmem:[%s484 + $0x20] sm:$0xff]
    %v490 = vld [vmem:[%s484 + $0x28] sm:$0xff]
    %v491 = vld [vmem:[%s484 + $0x30] sm:$0xff]
    %v492 = vld [vmem:[%s484 + $0x38] sm:$0xff]
    %v493 = vld [vmem:[%s484 + $0x40] sm:$0xff]
    %v494 = vld [vmem:[%s484 + $0x48] sm:$0xff]
    %v495 = vld [vmem:[%s484 + $0x50] sm:$0xff]
    %v496 = vld [vmem:[%s484 + $0x58] sm:$0xff]
    %v497 = vld [vmem:[%s484 + $0x60] sm:$0xff]
    %v498 = vld [vmem:[%s484 + $0x68] sm:$0xff]
    %v499 = vld [vmem:[%s484 + $0x70] sm:$0xff]
    %v500 = vld [vmem:[%s484 + $0x78] sm:$0xff]
    %501 = vmatprep.subr.mxu0 0.0
    %502 = vmatpush1.msra.mxu0 %v500
    %503 = vmatprep.subr.mxu0 0.0
    %504 = vmatpush1.msra.mxu0 %v499
    %505 = vmatprep.subr.mxu0 0.0
    %506 = vmatpush1.msra.mxu0 %v498
    %507 = vmatprep.subr.mxu0 0.0
    %508 = vmatpush1.msra.mxu0 %v497
    %509 = vmatprep.subr.mxu0 0.0
    %510 = vmatpush1.msra.mxu0 %v496
    %511 = vmatprep.subr.mxu0 0.0
    %512 = vmatpush1.msra.mxu0 %v495
    %513 = vmatprep.subr.mxu0 0.0
    %514 = vmatpush1.msra.mxu0 %v494
    %515 = vmatprep.subr.mxu0 0.0
    %516 = vmatpush1.msra.mxu0 %v493
    %517 = vmatprep.subr.mxu0 0.0
    %518 = vmatpush1.msra.mxu0 %v492
    %519 = vmatprep.subr.mxu0 0.0
    %520 = vmatpush1.msra.mxu0 %v491
    %521 = vmatprep.subr.mxu0 0.0
    %522 = vmatpush1.msra.mxu0 %v490
    %523 = vmatprep.subr.mxu0 0.0
    %524 = vmatpush1.msra.mxu0 %v489
    %525 = vmatprep.subr.mxu0 0.0
    %526 = vmatpush1.msra.mxu0 %v488
    %527 = vmatprep.subr.mxu0 0.0
    %528 = vmatpush1.msra.mxu0 %v487
    %529 = vmatprep.subr.mxu0 0.0
    %530 = vmatpush1.msra.mxu0 %v486
    %531 = vmatprep.subr.mxu0 0.0
    %532 = vmatpush1.msra.mxu0 %v485
    %533 = vmatprep.subr.mxu0 0.0
    %534 = vmatpush2.msra.mxu0 0.0
    %535 = vmatprep.subr.mxu0 0.0
    %536 = vmatpush2.msra.mxu0 0.0
    %537 = vmatprep.subr.mxu0 0.0
    %538 = vmatpush2.msra.mxu0 0.0
    %539 = vmatprep.subr.mxu0 0.0
    %540 = vmatpush2.msra.mxu0 0.0
    %541 = vmatprep.subr.mxu0 0.0
    %542 = vmatpush2.msra.mxu0 0.0
    %543 = vmatprep.subr.mxu0 0.0
    %544 = vmatpush2.msra.mxu0 0.0
    %545 = vmatprep.subr.mxu0 0.0
    %546 = vmatpush2.msra.mxu0 0.0
    %547 = vmatprep.subr.mxu0 0.0
    %548 = vmatpush2.msra.mxu0 0.0
    %549 = vmatprep.subr.mxu0 0.0
    %550 = vmatpush2.msra.mxu0 0.0
    %551 = vmatprep.subr.mxu0 0.0
    %552 = vmatpush2.msra.mxu0 0.0
    %553 = vmatprep.subr.mxu0 0.0
    %554 = vmatpush2.msra.mxu0 0.0
    %555 = vmatprep.subr.mxu0 0.0
    %556 = vmatpush2.msra.mxu0 0.0
    %557 = vmatprep.subr.mxu0 0.0
    %558 = vmatpush2.msra.mxu0 0.0
    %559 = vmatprep.subr.mxu0 0.0
    %560 = vmatpush2.msra.mxu0 0.0
    %561 = vmatprep.subr.mxu0 0.0
    %562 = vmatpush2.msra.mxu0 0.0
    %563 = vmatprep.subr.mxu0 0.0
    %564 = vmatpush2.msra.mxu0 0.0
    %565 = vmatprep.mubr.f32.mxu0 0.0
    %566 = vmatmul.mubr.f32.gmra.mxu0 %v479
    %v567 = vpop.f32.mrf.mxu0
    %v568 = vadd.f32 0.0, %v567
    %v569 = vpop.f32.mrf.mxu0
    %570 = vmatprep.mubr.f32.mxu0 0.0
    %571 = vmatmul.mubr.f32.gmra.mxu0 %v480
    %v572 = vpop.f32.mrf.mxu0
    %v573 = vadd.f32 0.0, %v572
    %v574 = vpop.f32.mrf.mxu0
    %575 = vmatprep.mubr.f32.mxu0 0.0
    %576 = vmatmul.mubr.f32.gmra.mxu0 %v481
    %v577 = vpop.f32.mrf.mxu0
    %v578 = vadd.f32 0.0, %v577
    %v579 = vpop.f32.mrf.mxu0
    %580 = vmatprep.mubr.f32.mxu0 0.0
    %581 = vmatmul.mubr.f32.gmra.mxu0 %v482
    %v582 = vpop.f32.mrf.mxu0
    %v583 = vadd.f32 0.0, %v582
    %v584 = vpop.f32.mrf.mxu0
    %585 = vmatprep.mubr.f32.mxu0 0.0
    %586 = vmatmul.mubr.f32.gmra.mxu0 %v483
    %v587 = vpop.f32.mrf.mxu0
    %v588 = vadd.f32 0.0, %v587
    %v589 = vpop.f32.mrf.mxu0
    %590 = vdwg.mxu0
    %591 = vmatprep.subr.mxu0 0.0
    %592 = vmatpush1.msra.mxu0 %v478
    %593 = vmatprep.subr.mxu0 0.0
    %594 = vmatpush1.msra.mxu0 %v477
    %595 = vmatprep.subr.mxu0 0.0
    %596 = vmatpush1.msra.mxu0 %v476
    %597 = vmatprep.subr.mxu0 0.0
    %598 = vmatpush1.msra.mxu0 %v475
    %599 = vmatprep.subr.mxu0 0.0
    %600 = vmatpush1.msra.mxu0 %v474
    %601 = vmatprep.subr.mxu0 0.0
    %602 = vmatpush1.msra.mxu0 %v473
    %603 = vmatprep.subr.mxu0 0.0
    %604 = vmatpush1.msra.mxu0 %v472
    %605 = vmatprep.subr.mxu0 0.0
    %606 = vmatpush1.msra.mxu0 %v471
    %607 = vmatprep.subr.mxu0 0.0
    %608 = vmatpush1.msra.mxu0 %v470
    %609 = vmatprep.subr.mxu0 0.0
    %610 = vmatpush1.msra.mxu0 %v469
    %611 = vmatprep.subr.mxu0 0.0
    %612 = vmatpush1.msra.mxu0 %v468
    %613 = vmatprep.subr.mxu0 0.0
    %614 = vmatpush1.msra.mxu0 %v467
    %615 = vmatprep.subr.mxu0 0.0
    %616 = vmatpush1.msra.mxu0 %v466
    %617 = vmatprep.subr.mxu0 0.0
    %618 = vmatpush1.msra.mxu0 %v465
    %619 = vmatprep.subr.mxu0 0.0
    %620 = vmatpush1.msra.mxu0 %v464
    %621 = vmatprep.subr.mxu0 0.0
    %622 = vmatpush1.msra.mxu0 %v463
    %623 = vmatprep.subr.mxu0 0.0
    %624 = vmatpush2.msra.mxu0 0.0
    %625 = vmatprep.subr.mxu0 0.0
    %626 = vmatpush2.msra.mxu0 0.0
    %627 = vmatprep.subr.mxu0 0.0
    %628 = vmatpush2.msra.mxu0 0.0
    %629 = vmatprep.subr.mxu0 0.0
    %630 = vmatpush2.msra.mxu0 0.0
    %631 = vmatprep.subr.mxu0 0.0
    %632 = vmatpush2.msra.mxu0 0.0
    %633 = vmatprep.subr.mxu0 0.0
    %634 = vmatpush2.msra.mxu0 0.0
    %635 = vmatprep.subr.mxu0 0.0
    %636 = vmatpush2.msra.mxu0 0.0
    %637 = vmatprep.subr.mxu0 0.0
    %638 = vmatpush2.msra.mxu0 0.0
    %639 = vmatprep.subr.mxu0 0.0
    %640 = vmatpush2.msra.mxu0 0.0
    %641 = vmatprep.subr.mxu0 0.0
    %642 = vmatpush2.msra.mxu0 0.0
    %643 = vmatprep.subr.mxu0 0.0
    %644 = vmatpush2.msra.mxu0 0.0
    %645 = vmatprep.subr.mxu0 0.0
    %646 = vmatpush2.msra.mxu0 0.0
    %647 = vmatprep.subr.mxu0 0.0
    %648 = vmatpush2.msra.mxu0 0.0
    %649 = vmatprep.subr.mxu0 0.0
    %650 = vmatpush2.msra.mxu0 0.0
    %651 = vmatprep.subr.mxu0 0.0
    %652 = vmatpush2.msra.mxu0 0.0
    %653 = vmatprep.subr.mxu0 0.0
    %654 = vmatpush2.msra.mxu0 0.0
    %655 = vmatprep.mubr.f32.mxu0 0.0
    %656 = vmatmul.mubr.f32.gmra.mxu0 %v458
    %v657 = vpop.f32.mrf.mxu0
    %v658 = vadd.f32 %v568, %v657
    %v659 = vpop.f32.mrf.mxu0
    %660 = vmatprep.mubr.f32.mxu0 0.0
    %661 = vmatmul.mubr.f32.gmra.mxu0 %v459
    %v662 = vpop.f32.mrf.mxu0
    %v663 = vadd.f32 %v573, %v662
    %v664 = vpop.f32.mrf.mxu0
    %665 = vmatprep.mubr.f32.mxu0 0.0
    %666 = vmatmul.mubr.f32.gmra.mxu0 %v460
    %v667 = vpop.f32.mrf.mxu0
    %v668 = vadd.f32 %v578, %v667
    %v669 = vpop.f32.mrf.mxu0
    %670 = vmatprep.mubr.f32.mxu0 0.0
    %671 = vmatmul.mubr.f32.gmra.mxu0 %v461
    %v672 = vpop.f32.mrf.mxu0
    %v673 = vadd.f32 %v583, %v672
    %v674 = vpop.f32.mrf.mxu0
    %675 = vmatprep.mubr.f32.mxu0 0.0
    %676 = vmatmul.mubr.f32.gmra.mxu0 %v462
    %v677 = vpop.f32.mrf.mxu0
    %v678 = vadd.f32 %v588, %v677
    %v679 = vpop.f32.mrf.mxu0
    %680 = vdwg.mxu0
    %v681 = vld [vmem:[#allocation3 + $0x2] sm:$0xff]
    %v682 = vld [vmem:[#allocation3 + $0xa] sm:$0xff]
    %v683 = vld [vmem:[#allocation3 + $0x12] sm:$0xff]
    %v684 = vld [vmem:[#allocation3 + $0x1a] sm:$0xff]
    %v685 = vld [vmem:[#allocation3 + $0x22] sm:$0x3]
    %s686 = scalar_lea.vmem %s3, 256
    %v687 = vld [vmem:[%s686] sm:$0xff]
    %v688 = vld [vmem:[%s686 + $0x8] sm:$0xff]
    %v689 = vld [vmem:[%s686 + $0x10] sm:$0xff]
    %v690 = vld [vmem:[%s686 + $0x18] sm:$0xff]
    %v691 = vld [vmem:[%s686 + $0x20] sm:$0xff]
    %v692 = vld [vmem:[%s686 + $0x28] sm:$0xff]
    %v693 = vld [vmem:[%s686 + $0x30] sm:$0xff]
    %v694 = vld [vmem:[%s686 + $0x38] sm:$0xff]
    %v695 = vld [vmem:[%s686 + $0x40] sm:$0xff]
    %v696 = vld [vmem:[%s686 + $0x48] sm:$0xff]
    %v697 = vld [vmem:[%s686 + $0x50] sm:$0xff]
    %v698 = vld [vmem:[%s686 + $0x58] sm:$0xff]
    %v699 = vld [vmem:[%s686 + $0x60] sm:$0xff]
    %v700 = vld [vmem:[%s686 + $0x68] sm:$0xff]
    %v701 = vld [vmem:[%s686 + $0x70] sm:$0xff]
    %v702 = vld [vmem:[%s686 + $0x78] sm:$0xff]
    %703 = vmatprep.subr.mxu0 0.0
    %704 = vmatpush1.msra.mxu0 %v702
    %705 = vmatprep.subr.mxu0 0.0
    %706 = vmatpush1.msra.mxu0 %v701
    %707 = vmatprep.subr.mxu0 0.0
    %708 = vmatpush1.msra.mxu0 %v700
    %709 = vmatprep.subr.mxu0 0.0
    %710 = vmatpush1.msra.mxu0 %v699
    %711 = vmatprep.subr.mxu0 0.0
    %712 = vmatpush1.msra.mxu0 %v698
    %713 = vmatprep.subr.mxu0 0.0
    %714 = vmatpush1.msra.mxu0 %v697
    %715 = vmatprep.subr.mxu0 0.0
    %716 = vmatpush1.msra.mxu0 %v696
    %717 = vmatprep.subr.mxu0 0.0
    %718 = vmatpush1.msra.mxu0 %v695
    %719 = vmatprep.subr.mxu0 0.0
    %720 = vmatpush1.msra.mxu0 %v694
    %721 = vmatprep.subr.mxu0 0.0
    %722 = vmatpush1.msra.mxu0 %v693
    %723 = vmatprep.subr.mxu0 0.0
    %724 = vmatpush1.msra.mxu0 %v692
    %725 = vmatprep.subr.mxu0 0.0
    %726 = vmatpush1.msra.mxu0 %v691
    %727 = vmatprep.subr.mxu0 0.0
    %728 = vmatpush1.msra.mxu0 %v690
    %729 = vmatprep.subr.mxu0 0.0
    %730 = vmatpush1.msra.mxu0 %v689
    %731 = vmatprep.subr.mxu0 0.0
    %732 = vmatpush1.msra.mxu0 %v688
    %733 = vmatprep.subr.mxu0 0.0
    %734 = vmatpush1.msra.mxu0 %v687
    %735 = vmatprep.subr.mxu0 0.0
    %736 = vmatpush2.msra.mxu0 0.0
    %737 = vmatprep.subr.mxu0 0.0
    %738 = vmatpush2.msra.mxu0 0.0
    %739 = vmatprep.subr.mxu0 0.0
    %740 = vmatpush2.msra.mxu0 0.0
    %741 = vmatprep.subr.mxu0 0.0
    %742 = vmatpush2.msra.mxu0 0.0
    %743 = vmatprep.subr.mxu0 0.0
    %744 = vmatpush2.msra.mxu0 0.0
    %745 = vmatprep.subr.mxu0 0.0
    %746 = vmatpush2.msra.mxu0 0.0
    %747 = vmatprep.subr.mxu0 0.0
    %748 = vmatpush2.msra.mxu0 0.0
    %749 = vmatprep.subr.mxu0 0.0
    %750 = vmatpush2.msra.mxu0 0.0
    %751 = vmatprep.subr.mxu0 0.0
    %752 = vmatpush2.msra.mxu0 0.0
    %753 = vmatprep.subr.mxu0 0.0
    %754 = vmatpush2.msra.mxu0 0.0
    %755 = vmatprep.subr.mxu0 0.0
    %756 = vmatpush2.msra.mxu0 0.0
    %757 = vmatprep.subr.mxu0 0.0
    %758 = vmatpush2.msra.mxu0 0.0
    %759 = vmatprep.subr.mxu0 0.0
    %760 = vmatpush2.msra.mxu0 0.0
    %761 = vmatprep.subr.mxu0 0.0
    %762 = vmatpush2.msra.mxu0 0.0
    %763 = vmatprep.subr.mxu0 0.0
    %764 = vmatpush2.msra.mxu0 0.0
    %765 = vmatprep.subr.mxu0 0.0
    %766 = vmatpush2.msra.mxu0 0.0
    %767 = vmatprep.mubr.f32.mxu0 0.0
    %768 = vmatmul.mubr.f32.gmra.mxu0 %v681
    %v769 = vpop.f32.mrf.mxu0
    %v770 = vadd.f32 0.0, %v769
    %v771 = vpop.f32.mrf.mxu0
    %772 = vmatprep.mubr.f32.mxu0 0.0
    %773 = vmatmul.mubr.f32.gmra.mxu0 %v682
    %v774 = vpop.f32.mrf.mxu0
    %v775 = vadd.f32 0.0, %v774
    %v776 = vpop.f32.mrf.mxu0
    %777 = vmatprep.mubr.f32.mxu0 0.0
    %778 = vmatmul.mubr.f32.gmra.mxu0 %v683
    %v779 = vpop.f32.mrf.mxu0
    %v780 = vadd.f32 0.0, %v779
    %v781 = vpop.f32.mrf.mxu0
    %782 = vmatprep.mubr.f32.mxu0 0.0
    %783 = vmatmul.mubr.f32.gmra.mxu0 %v684
    %v784 = vpop.f32.mrf.mxu0
    %v785 = vadd.f32 0.0, %v784
    %v786 = vpop.f32.mrf.mxu0
    %787 = vmatprep.mubr.f32.mxu0 0.0
    %788 = vmatmul.mubr.f32.gmra.mxu0 %v685
    %v789 = vpop.f32.mrf.mxu0
    %v790 = vadd.f32 0.0, %v789
    %v791 = vpop.f32.mrf.mxu0
    %792 = vdwg.mxu0
    %v793 = vadd.f32 %v658, %v770
    %v794 = vadd.f32 %v663, %v775
    %v795 = vadd.f32 %v668, %v780
    %v796 = vadd.f32 %v673, %v785
    %v797 = vadd.f32 %v678, %v790
    %v798 = vld [vmem:[%s4] sm:$0x1]
    %v800 = vlaneseq
    %v801 = vshrl.u32 %v800, 7
    %v802 = vsub.s32 0, %v801
    %v803 = vrot.slane %v798, %v802
    %v805 = vadd.f32 %v793, %v803
    %v806 = vadd.f32 %v794, %v803
    %v807 = vadd.f32 %v795, %v803
    %v808 = vadd.f32 %v796, %v803
    %v809 = vadd.f32 %v797, %v803
    %v810 = vmax.f32 %v805, 0.0
    %v811 = vmax.f32 %v806, 0.0
    %v812 = vmax.f32 %v807, 0.0
    %v813 = vmax.f32 %v808, 0.0
    %v814 = vmax.f32 %v809, 0.0
    %815 = vst [vmem:[%s7] sm:$0xff] %v810
    %816 = vst [vmem:[%s7 + $0x8] sm:$0xff] %v811
    %s817 = scalar_lea.vmem %s7, 16
    %818 = vst [vmem:[%s817 - $0x2] sm:$0xfc] %v812
    %819 = vst [vmem:[%s817 + $0x6] sm:$0xff] %v813
    %820 = vst [vmem:[%s817 + $0xe] sm:$0x3] %v814
    %v821 = vld [vmem:[%s5] sm:$0xff]
    %vm822 = vcmask 277504
    %v824 = vsel %vm822, %v821, 0
    %vm826 = vcmask 1041408
    %v828 = vsel %vm826, %v814, 0
    %830 = vmatprep.subr.mxu0 0.0
    %831 = vmatpush1.msra.mxu0 0.0
    %832 = vmatprep.subr.mxu0 0.0
    %833 = vmatpush1.msra.mxu0 0.0
    %834 = vmatprep.subr.mxu0 0.0
    %835 = vmatpush1.msra.mxu0 0.0
    %836 = vmatprep.subr.mxu0 0.0
    %837 = vmatpush1.msra.mxu0 0.0
    %838 = vmatprep.subr.mxu0 0.0
    %839 = vmatpush1.msra.mxu0 0.0
    %840 = vmatprep.subr.mxu0 0.0
    %841 = vmatpush1.msra.mxu0 0.0
    %842 = vmatprep.subr.mxu0 0.0
    %843 = vmatpush1.msra.mxu0 0.0
    %844 = vmatprep.subr.mxu0 0.0
    %845 = vmatpush1.msra.mxu0 0.0
    %846 = vmatprep.subr.mxu0 0.0
    %847 = vmatpush1.msra.mxu0 0.0
    %848 = vmatprep.subr.mxu0 0.0
    %849 = vmatpush1.msra.mxu0 0.0
    %850 = vmatprep.subr.mxu0 0.0
    %851 = vmatpush1.msra.mxu0 0.0
    %852 = vmatprep.subr.mxu0 0.0
    %853 = vmatpush1.msra.mxu0 %v828
    %854 = vmatprep.subr.mxu0 0.0
    %855 = vmatpush1.msra.mxu0 %v813
    %856 = vmatprep.subr.mxu0 0.0
    %857 = vmatpush1.msra.mxu0 %v812
    %858 = vmatprep.subr.mxu0 0.0
    %859 = vmatpush1.msra.mxu0 %v811
    %860 = vmatprep.subr.mxu0 0.0
    %861 = vmatpush1.msra.mxu0 %v810
    %862 = vmatprep.subr.mxu0 0.0
    %863 = vmatpush2.msra.mxu0 0.0
    %864 = vmatprep.subr.mxu0 0.0
    %865 = vmatpush2.msra.mxu0 0.0
    %866 = vmatprep.subr.mxu0 0.0
    %867 = vmatpush2.msra.mxu0 0.0
    %868 = vmatprep.subr.mxu0 0.0
    %869 = vmatpush2.msra.mxu0 0.0
    %870 = vmatprep.subr.mxu0 0.0
    %871 = vmatpush2.msra.mxu0 0.0
    %872 = vmatprep.subr.mxu0 0.0
    %873 = vmatpush2.msra.mxu0 0.0
    %874 = vmatprep.subr.mxu0 0.0
    %875 = vmatpush2.msra.mxu0 0.0
    %876 = vmatprep.subr.mxu0 0.0
    %877 = vmatpush2.msra.mxu0 0.0
    %878 = vmatprep.subr.mxu0 0.0
    %879 = vmatpush2.msra.mxu0 0.0
    %880 = vmatprep.subr.mxu0 0.0
    %881 = vmatpush2.msra.mxu0 0.0
    %882 = vmatprep.subr.mxu0 0.0
    %883 = vmatpush2.msra.mxu0 0.0
    %884 = vmatprep.subr.mxu0 0.0
    %885 = vmatpush2.msra.mxu0 0.0
    %886 = vmatprep.subr.mxu0 0.0
    %887 = vmatpush2.msra.mxu0 0.0
    %888 = vmatprep.subr.mxu0 0.0
    %889 = vmatpush2.msra.mxu0 0.0
    %890 = vmatprep.subr.mxu0 0.0
    %891 = vmatpush2.msra.mxu0 0.0
    %892 = vmatprep.subr.mxu0 0.0
    %893 = vmatpush2.msra.mxu0 0.0
    %894 = vmatprep.mubr.f32.mxu0 0.0
    %895 = vmatmul.mubr.f32.gmra.mxu0 %v824
    %v896 = vpop.f32.mrf.mxu0
    %v897 = vadd.f32 0.0, %v896
    %v898 = vpop.f32.mrf.mxu0
    %899 = vdwg.mxu0
    %s900 = scalar_lea.vmem %s5, 8
    %v901 = vld [vmem:[%s900] sm:$0xff]
    %v903 = vsel %vm822, %v901, 0
    %905 = vmatprep.subr.mxu0 0.0
    %906 = vmatpush1.msra.mxu0 0.0
    %907 = vmatprep.subr.mxu0 0.0
    %908 = vmatpush1.msra.mxu0 0.0
    %909 = vmatprep.subr.mxu0 0.0
    %910 = vmatpush1.msra.mxu0 0.0
    %911 = vmatprep.subr.mxu0 0.0
    %912 = vmatpush1.msra.mxu0 0.0
    %913 = vmatprep.subr.mxu0 0.0
    %914 = vmatpush1.msra.mxu0 0.0
    %915 = vmatprep.subr.mxu0 0.0
    %916 = vmatpush1.msra.mxu0 0.0
    %917 = vmatprep.subr.mxu0 0.0
    %918 = vmatpush1.msra.mxu0 0.0
    %919 = vmatprep.subr.mxu0 0.0
    %920 = vmatpush1.msra.mxu0 0.0
    %921 = vmatprep.subr.mxu0 0.0
    %922 = vmatpush1.msra.mxu0 0.0
    %923 = vmatprep.subr.mxu0 0.0
    %924 = vmatpush1.msra.mxu0 0.0
    %925 = vmatprep.subr.mxu0 0.0
    %926 = vmatpush1.msra.mxu0 0.0
    %927 = vmatprep.subr.mxu0 0.0
    %928 = vmatpush1.msra.mxu0 %v828
    %929 = vmatprep.subr.mxu0 0.0
    %930 = vmatpush1.msra.mxu0 %v813
    %931 = vmatprep.subr.mxu0 0.0
    %932 = vmatpush1.msra.mxu0 %v812
    %933 = vmatprep.subr.mxu0 0.0
    %934 = vmatpush1.msra.mxu0 %v811
    %935 = vmatprep.subr.mxu0 0.0
    %936 = vmatpush1.msra.mxu0 %v810
    %937 = vmatprep.subr.mxu0 0.0
    %938 = vmatpush2.msra.mxu0 0.0
    %939 = vmatprep.subr.mxu0 0.0
    %940 = vmatpush2.msra.mxu0 0.0
    %941 = vmatprep.subr.mxu0 0.0
    %942 = vmatpush2.msra.mxu0 0.0
    %943 = vmatprep.subr.mxu0 0.0
    %944 = vmatpush2.msra.mxu0 0.0
    %945 = vmatprep.subr.mxu0 0.0
    %946 = vmatpush2.msra.mxu0 0.0
    %947 = vmatprep.subr.mxu0 0.0
    %948 = vmatpush2.msra.mxu0 0.0
    %949 = vmatprep.subr.mxu0 0.0
    %950 = vmatpush2.msra.mxu0 0.0
    %951 = vmatprep.subr.mxu0 0.0
    %952 = vmatpush2.msra.mxu0 0.0
    %953 = vmatprep.subr.mxu0 0.0
    %954 = vmatpush2.msra.mxu0 0.0
    %955 = vmatprep.subr.mxu0 0.0
    %956 = vmatpush2.msra.mxu0 0.0
    %957 = vmatprep.subr.mxu0 0.0
    %958 = vmatpush2.msra.mxu0 0.0
    %959 = vmatprep.subr.mxu0 0.0
    %960 = vmatpush2.msra.mxu0 0.0
    %961 = vmatprep.subr.mxu0 0.0
    %962 = vmatpush2.msra.mxu0 0.0
    %963 = vmatprep.subr.mxu0 0.0
    %964 = vmatpush2.msra.mxu0 0.0
    %965 = vmatprep.subr.mxu0 0.0
    %966 = vmatpush2.msra.mxu0 0.0
    %967 = vmatprep.subr.mxu0 0.0
    %968 = vmatpush2.msra.mxu0 0.0
    %969 = vmatprep.mubr.f32.mxu0 0.0
    %970 = vmatmul.mubr.f32.gmra.mxu0 %v903
    %v971 = vpop.f32.mrf.mxu0
    %v972 = vadd.f32 0.0, %v971
    %v973 = vpop.f32.mrf.mxu0
    %974 = vdwg.mxu0
    %v975 = vmax.f32 %v897, %v972
    %v976 = vld [vmem:[#allocation6] sm:$0xff]
    %v977 = vld [vmem:[#allocation6 + $0x8] sm:$0xff]
    %v978 = vld [vmem:[#allocation6 + $0x10] sm:$0xff]
    %v979 = vld [vmem:[#allocation6 + $0x18] sm:$0xff]
    %v980 = vld [vmem:[#allocation6 + $0x20] sm:$0xff]
    %v981 = vld [vmem:[#allocation6 + $0x28] sm:$0xff]
    %v982 = vld [vmem:[#allocation6 + $0x30] sm:$0xff]
    %v983 = vld [vmem:[#allocation6 + $0x38] sm:$0xff]
    %v984 = vld [vmem:[#allocation6 + $0x40] sm:$0xff]
    %v985 = vld [vmem:[#allocation6 + $0x48] sm:$0xff]
    %v986 = vld [vmem:[#allocation6 + $0x50] sm:$0xff]
    %v987 = vld [vmem:[#allocation6 + $0x58] sm:$0xff]
    %v988 = vld [vmem:[#allocation6 + $0x60] sm:$0xff]
    %v989 = vld [vmem:[#allocation6 + $0x68] sm:$0xff]
    %v990 = vld [vmem:[#allocation6 + $0x70] sm:$0xff]
    %v991 = vld [vmem:[#allocation6 + $0x78] sm:$0xff]
    %992 = vmatprep.subr.mxu0 0.0
    %993 = vmatpush1.msra.mxu0 %v991
    %994 = vmatprep.subr.mxu0 0.0
    %995 = vmatpush1.msra.mxu0 %v990
    %996 = vmatprep.subr.mxu0 0.0
    %997 = vmatpush1.msra.mxu0 %v989
    %998 = vmatprep.subr.mxu0 0.0
    %999 = vmatpush1.msra.mxu0 %v988
    %1000 = vmatprep.subr.mxu0 0.0
    %1001 = vmatpush1.msra.mxu0 %v987
    %1002 = vmatprep.subr.mxu0 0.0
    %1003 = vmatpush1.msra.mxu0 %v986
    %1004 = vmatprep.subr.mxu0 0.0
    %1005 = vmatpush1.msra.mxu0 %v985
    %1006 = vmatprep.subr.mxu0 0.0
    %1007 = vmatpush1.msra.mxu0 %v984
    %1008 = vmatprep.subr.mxu0 0.0
    %1009 = vmatpush1.msra.mxu0 %v983
    %1010 = vmatprep.subr.mxu0 0.0
    %1011 = vmatpush1.msra.mxu0 %v982
    %1012 = vmatprep.subr.mxu0 0.0
    %1013 = vmatpush1.msra.mxu0 %v981
    %1014 = vmatprep.subr.mxu0 0.0
    %1015 = vmatpush1.msra.mxu0 %v980
    %1016 = vmatprep.subr.mxu0 0.0
    %1017 = vmatpush1.msra.mxu0 %v979
    %1018 = vmatprep.subr.mxu0 0.0
    %1019 = vmatpush1.msra.mxu0 %v978
    %1020 = vmatprep.subr.mxu0 0.0
    %1021 = vmatpush1.msra.mxu0 %v977
    %1022 = vmatprep.subr.mxu0 0.0
    %1023 = vmatpush1.msra.mxu0 %v976
    %1024 = vmatprep.subr.mxu0 0.0
    %1025 = vmatpush2.msra.mxu0 0.0
    %1026 = vmatprep.subr.mxu0 0.0
    %1027 = vmatpush2.msra.mxu0 0.0
    %1028 = vmatprep.subr.mxu0 0.0
    %1029 = vmatpush2.msra.mxu0 0.0
    %1030 = vmatprep.subr.mxu0 0.0
    %1031 = vmatpush2.msra.mxu0 0.0
    %1032 = vmatprep.subr.mxu0 0.0
    %1033 = vmatpush2.msra.mxu0 0.0
    %1034 = vmatprep.subr.mxu0 0.0
    %1035 = vmatpush2.msra.mxu0 0.0
    %1036 = vmatprep.subr.mxu0 0.0
    %1037 = vmatpush2.msra.mxu0 0.0
    %1038 = vmatprep.subr.mxu0 0.0
    %1039 = vmatpush2.msra.mxu0 0.0
    %1040 = vmatprep.subr.mxu0 0.0
    %1041 = vmatpush2.msra.mxu0 0.0
    %1042 = vmatprep.subr.mxu0 0.0
    %1043 = vmatpush2.msra.mxu0 0.0
    %1044 = vmatprep.subr.mxu0 0.0
    %1045 = vmatpush2.msra.mxu0 0.0
    %1046 = vmatprep.subr.mxu0 0.0
    %1047 = vmatpush2.msra.mxu0 0.0
    %1048 = vmatprep.subr.mxu0 0.0
    %1049 = vmatpush2.msra.mxu0 0.0
    %1050 = vmatprep.subr.mxu0 0.0
    %1051 = vmatpush2.msra.mxu0 0.0
    %1052 = vmatprep.subr.mxu0 0.0
    %1053 = vmatpush2.msra.mxu0 0.0
    %1054 = vmatprep.subr.mxu0 0.0
    %1055 = vmatpush2.msra.mxu0 0.0
    %1056 = vmatprep.mubr.f32.mxu0 0.0
    %1057 = vmatmul.mubr.f32.gmra.mxu0 %v975
    %v1058 = vpop.f32.mrf.mxu0
    %v1059 = vadd.f32 0.0, %v1058
    %v1060 = vpop.f32.mrf.mxu0
    %1061 = vdwg.mxu0
    %s1062 = scalar_lea.vmem [#allocation6], 128
    %v1063 = vld [vmem:[%s1062] sm:$0xff]
    %v1064 = vld [vmem:[%s1062 + $0x8] sm:$0xff]
    %v1065 = vld [vmem:[%s1062 + $0x10] sm:$0xff]
    %v1066 = vld [vmem:[%s1062 + $0x18] sm:$0xff]
    %v1067 = vld [vmem:[%s1062 + $0x20] sm:$0xff]
    %v1068 = vld [vmem:[%s1062 + $0x28] sm:$0xff]
    %v1069 = vld [vmem:[%s1062 + $0x30] sm:$0xff]
    %v1070 = vld [vmem:[%s1062 + $0x38] sm:$0xff]
    %v1071 = vld [vmem:[%s1062 + $0x40] sm:$0xff]
    %v1072 = vld [vmem:[%s1062 + $0x48] sm:$0xff]
    %v1073 = vld [vmem:[%s1062 + $0x50] sm:$0xff]
    %v1074 = vld [vmem:[%s1062 + $0x58] sm:$0xff]
    %v1075 = vld [vmem:[%s1062 + $0x60] sm:$0xff]
    %v1076 = vld [vmem:[%s1062 + $0x68] sm:$0xff]
    %v1077 = vld [vmem:[%s1062 + $0x70] sm:$0xff]
    %v1078 = vld [vmem:[%s1062 + $0x78] sm:$0xff]
    %1079 = vmatprep.subr.mxu0 0.0
    %1080 = vmatpush1.msra.mxu0 %v1078
    %1081 = vmatprep.subr.mxu0 0.0
    %1082 = vmatpush1.msra.mxu0 %v1077
    %1083 = vmatprep.subr.mxu0 0.0
    %1084 = vmatpush1.msra.mxu0 %v1076
    %1085 = vmatprep.subr.mxu0 0.0
    %1086 = vmatpush1.msra.mxu0 %v1075
    %1087 = vmatprep.subr.mxu0 0.0
    %1088 = vmatpush1.msra.mxu0 %v1074
    %1089 = vmatprep.subr.mxu0 0.0
    %1090 = vmatpush1.msra.mxu0 %v1073
    %1091 = vmatprep.subr.mxu0 0.0
    %1092 = vmatpush1.msra.mxu0 %v1072
    %1093 = vmatprep.subr.mxu0 0.0
    %1094 = vmatpush1.msra.mxu0 %v1071
    %1095 = vmatprep.subr.mxu0 0.0
    %1096 = vmatpush1.msra.mxu0 %v1070
    %1097 = vmatprep.subr.mxu0 0.0
    %1098 = vmatpush1.msra.mxu0 %v1069
    %1099 = vmatprep.subr.mxu0 0.0
    %1100 = vmatpush1.msra.mxu0 %v1068
    %1101 = vmatprep.subr.mxu0 0.0
    %1102 = vmatpush1.msra.mxu0 %v1067
    %1103 = vmatprep.subr.mxu0 0.0
    %1104 = vmatpush1.msra.mxu0 %v1066
    %1105 = vmatprep.subr.mxu0 0.0
    %1106 = vmatpush1.msra.mxu0 %v1065
    %1107 = vmatprep.subr.mxu0 0.0
    %1108 = vmatpush1.msra.mxu0 %v1064
    %1109 = vmatprep.subr.mxu0 0.0
    %1110 = vmatpush1.msra.mxu0 %v1063
    %1111 = vmatprep.subr.mxu0 0.0
    %1112 = vmatpush2.msra.mxu0 0.0
    %1113 = vmatprep.subr.mxu0 0.0
    %1114 = vmatpush2.msra.mxu0 0.0
    %1115 = vmatprep.subr.mxu0 0.0
    %1116 = vmatpush2.msra.mxu0 0.0
    %1117 = vmatprep.subr.mxu0 0.0
    %1118 = vmatpush2.msra.mxu0 0.0
    %1119 = vmatprep.subr.mxu0 0.0
    %1120 = vmatpush2.msra.mxu0 0.0
    %1121 = vmatprep.subr.mxu0 0.0
    %1122 = vmatpush2.msra.mxu0 0.0
    %1123 = vmatprep.subr.mxu0 0.0
    %1124 = vmatpush2.msra.mxu0 0.0
    %1125 = vmatprep.subr.mxu0 0.0
    %1126 = vmatpush2.msra.mxu0 0.0
    %1127 = vmatprep.subr.mxu0 0.0
    %1128 = vmatpush2.msra.mxu0 0.0
    %1129 = vmatprep.subr.mxu0 0.0
    %1130 = vmatpush2.msra.mxu0 0.0
    %1131 = vmatprep.subr.mxu0 0.0
    %1132 = vmatpush2.msra.mxu0 0.0
    %1133 = vmatprep.subr.mxu0 0.0
    %1134 = vmatpush2.msra.mxu0 0.0
    %1135 = vmatprep.subr.mxu0 0.0
    %1136 = vmatpush2.msra.mxu0 0.0
    %1137 = vmatprep.subr.mxu0 0.0
    %1138 = vmatpush2.msra.mxu0 0.0
    %1139 = vmatprep.subr.mxu0 0.0
    %1140 = vmatpush2.msra.mxu0 0.0
    %1141 = vmatprep.subr.mxu0 0.0
    %1142 = vmatpush2.msra.mxu0 0.0
    %1143 = vmatprep.mubr.f32.mxu0 0.0
    %1144 = vmatmul.mubr.f32.gmra.mxu0 %v975
    %v1145 = vpop.f32.mrf.mxu0
    %v1146 = vadd.f32 0.0, %v1145
    %v1147 = vpop.f32.mrf.mxu0
    %1148 = vdwg.mxu0
    %v1149 = vmax.f32 %v1059, %v1146
    %s1150 = scalar_lea.vmem %s5, 16
    %v1151 = vld [vmem:[%s1150] sm:$0xff]
    %v1153 = vsel %vm822, %v1151, 0
    %1155 = vmatprep.subr.mxu0 0.0
    %1156 = vmatpush1.msra.mxu0 0.0
    %1157 = vmatprep.subr.mxu0 0.0
    %1158 = vmatpush1.msra.mxu0 0.0
    %1159 = vmatprep.subr.mxu0 0.0
    %1160 = vmatpush1.msra.mxu0 0.0
    %1161 = vmatprep.subr.mxu0 0.0
    %1162 = vmatpush1.msra.mxu0 0.0
    %1163 = vmatprep.subr.mxu0 0.0
    %1164 = vmatpush1.msra.mxu0 0.0
    %1165 = vmatprep.subr.mxu0 0.0
    %1166 = vmatpush1.msra.mxu0 0.0
    %1167 = vmatprep.subr.mxu0 0.0
    %1168 = vmatpush1.msra.mxu0 0.0
    %1169 = vmatprep.subr.mxu0 0.0
    %1170 = vmatpush1.msra.mxu0 0.0
    %1171 = vmatprep.subr.mxu0 0.0
    %1172 = vmatpush1.msra.mxu0 0.0
    %1173 = vmatprep.subr.mxu0 0.0
    %1174 = vmatpush1.msra.mxu0 0.0
    %1175 = vmatprep.subr.mxu0 0.0
    %1176 = vmatpush1.msra.mxu0 0.0
    %1177 = vmatprep.subr.mxu0 0.0
    %1178 = vmatpush1.msra.mxu0 %v828
    %1179 = vmatprep.subr.mxu0 0.0
    %1180 = vmatpush1.msra.mxu0 %v813
    %1181 = vmatprep.subr.mxu0 0.0
    %1182 = vmatpush1.msra.mxu0 %v812
    %1183 = vmatprep.subr.mxu0 0.0
    %1184 = vmatpush1.msra.mxu0 %v811
    %1185 = vmatprep.subr.mxu0 0.0
    %1186 = vmatpush1.msra.mxu0 %v810
    %1187 = vmatprep.subr.mxu0 0.0
    %1188 = vmatpush2.msra.mxu0 0.0
    %1189 = vmatprep.subr.mxu0 0.0
    %1190 = vmatpush2.msra.mxu0 0.0
    %1191 = vmatprep.subr.mxu0 0.0
    %1192 = vmatpush2.msra.mxu0 0.0
    %1193 = vmatprep.subr.mxu0 0.0
    %1194 = vmatpush2.msra.mxu0 0.0
    %1195 = vmatprep.subr.mxu0 0.0
    %1196 = vmatpush2.msra.mxu0 0.0
    %1197 = vmatprep.subr.mxu0 0.0
    %1198 = vmatpush2.msra.mxu0 0.0
    %1199 = vmatprep.subr.mxu0 0.0
    %1200 = vmatpush2.msra.mxu0 0.0
    %1201 = vmatprep.subr.mxu0 0.0
    %1202 = vmatpush2.msra.mxu0 0.0
    %1203 = vmatprep.subr.mxu0 0.0
    %1204 = vmatpush2.msra.mxu0 0.0
    %1205 = vmatprep.subr.mxu0 0.0
    %1206 = vmatpush2.msra.mxu0 0.0
    %1207 = vmatprep.subr.mxu0 0.0
    %1208 = vmatpush2.msra.mxu0 0.0
    %1209 = vmatprep.subr.mxu0 0.0
    %1210 = vmatpush2.msra.mxu0 0.0
    %1211 = vmatprep.subr.mxu0 0.0
    %1212 = vmatpush2.msra.mxu0 0.0
    %1213 = vmatprep.subr.mxu0 0.0
    %1214 = vmatpush2.msra.mxu0 0.0
    %1215 = vmatprep.subr.mxu0 0.0
    %1216 = vmatpush2.msra.mxu0 0.0
    %1217 = vmatprep.subr.mxu0 0.0
    %1218 = vmatpush2.msra.mxu0 0.0
    %1219 = vmatprep.mubr.f32.mxu0 0.0
    %1220 = vmatmul.mubr.f32.gmra.mxu0 %v1153
    %v1221 = vpop.f32.mrf.mxu0
    %v1222 = vadd.f32 0.0, %v1221
    %v1223 = vpop.f32.mrf.mxu0
    %1224 = vdwg.mxu0
    %s1225 = scalar_lea.vmem %s5, 24
    %v1226 = vld [vmem:[%s1225] sm:$0xff]
    %v1228 = vsel %vm822, %v1226, 0
    %1230 = vmatprep.subr.mxu0 0.0
    %1231 = vmatpush1.msra.mxu0 0.0
    %1232 = vmatprep.subr.mxu0 0.0
    %1233 = vmatpush1.msra.mxu0 0.0
    %1234 = vmatprep.subr.mxu0 0.0
    %1235 = vmatpush1.msra.mxu0 0.0
    %1236 = vmatprep.subr.mxu0 0.0
    %1237 = vmatpush1.msra.mxu0 0.0
    %1238 = vmatprep.subr.mxu0 0.0
    %1239 = vmatpush1.msra.mxu0 0.0
    %1240 = vmatprep.subr.mxu0 0.0
    %1241 = vmatpush1.msra.mxu0 0.0
    %1242 = vmatprep.subr.mxu0 0.0
    %1243 = vmatpush1.msra.mxu0 0.0
    %1244 = vmatprep.subr.mxu0 0.0
    %1245 = vmatpush1.msra.mxu0 0.0
    %1246 = vmatprep.subr.mxu0 0.0
    %1247 = vmatpush1.msra.mxu0 0.0
    %1248 = vmatprep.subr.mxu0 0.0
    %1249 = vmatpush1.msra.mxu0 0.0
    %1250 = vmatprep.subr.mxu0 0.0
    %1251 = vmatpush1.msra.mxu0 0.0
    %1252 = vmatprep.subr.mxu0 0.0
    %1253 = vmatpush1.msra.mxu0 %v828
    %1254 = vmatprep.subr.mxu0 0.0
    %1255 = vmatpush1.msra.mxu0 %v813
    %1256 = vmatprep.subr.mxu0 0.0
    %1257 = vmatpush1.msra.mxu0 %v812
    %1258 = vmatprep.subr.mxu0 0.0
    %1259 = vmatpush1.msra.mxu0 %v811
    %1260 = vmatprep.subr.mxu0 0.0
    %1261 = vmatpush1.msra.mxu0 %v810
    %1262 = vmatprep.subr.mxu0 0.0
    %1263 = vmatpush2.msra.mxu0 0.0
    %1264 = vmatprep.subr.mxu0 0.0
    %1265 = vmatpush2.msra.mxu0 0.0
    %1266 = vmatprep.subr.mxu0 0.0
    %1267 = vmatpush2.msra.mxu0 0.0
    %1268 = vmatprep.subr.mxu0 0.0
    %1269 = vmatpush2.msra.mxu0 0.0
    %1270 = vmatprep.subr.mxu0 0.0
    %1271 = vmatpush2.msra.mxu0 0.0
    %1272 = vmatprep.subr.mxu0 0.0
    %1273 = vmatpush2.msra.mxu0 0.0
    %1274 = vmatprep.subr.mxu0 0.0
    %1275 = vmatpush2.msra.mxu0 0.0
    %1276 = vmatprep.subr.mxu0 0.0
    %1277 = vmatpush2.msra.mxu0 0.0
    %1278 = vmatprep.subr.mxu0 0.0
    %1279 = vmatpush2.msra.mxu0 0.0
    %1280 = vmatprep.subr.mxu0 0.0
    %1281 = vmatpush2.msra.mxu0 0.0
    %1282 = vmatprep.subr.mxu0 0.0
    %1283 = vmatpush2.msra.mxu0 0.0
    %1284 = vmatprep.subr.mxu0 0.0
    %1285 = vmatpush2.msra.mxu0 0.0
    %1286 = vmatprep.subr.mxu0 0.0
    %1287 = vmatpush2.msra.mxu0 0.0
    %1288 = vmatprep.subr.mxu0 0.0
    %1289 = vmatpush2.msra.mxu0 0.0
    %1290 = vmatprep.subr.mxu0 0.0
    %1291 = vmatpush2.msra.mxu0 0.0
    %1292 = vmatprep.subr.mxu0 0.0
    %1293 = vmatpush2.msra.mxu0 0.0
    %1294 = vmatprep.mubr.f32.mxu0 0.0
    %1295 = vmatmul.mubr.f32.gmra.mxu0 %v1228
    %v1296 = vpop.f32.mrf.mxu0
    %v1297 = vadd.f32 0.0, %v1296
    %v1298 = vpop.f32.mrf.mxu0
    %1299 = vdwg.mxu0
    %v1300 = vmax.f32 %v1222, %v1297
    %s1301 = scalar_lea.vmem [#allocation6], 256
    %v1302 = vld [vmem:[%s1301] sm:$0xff]
    %v1303 = vld [vmem:[%s1301 + $0x8] sm:$0xff]
    %v1304 = vld [vmem:[%s1301 + $0x10] sm:$0xff]
    %v1305 = vld [vmem:[%s1301 + $0x18] sm:$0xff]
    %v1306 = vld [vmem:[%s1301 + $0x20] sm:$0xff]
    %v1307 = vld [vmem:[%s1301 + $0x28] sm:$0xff]
    %v1308 = vld [vmem:[%s1301 + $0x30] sm:$0xff]
    %v1309 = vld [vmem:[%s1301 + $0x38] sm:$0xff]
    %v1310 = vld [vmem:[%s1301 + $0x40] sm:$0xff]
    %v1311 = vld [vmem:[%s1301 + $0x48] sm:$0xff]
    %v1312 = vld [vmem:[%s1301 + $0x50] sm:$0xff]
    %v1313 = vld [vmem:[%s1301 + $0x58] sm:$0xff]
    %v1314 = vld [vmem:[%s1301 + $0x60] sm:$0xff]
    %v1315 = vld [vmem:[%s1301 + $0x68] sm:$0xff]
    %v1316 = vld [vmem:[%s1301 + $0x70] sm:$0xff]
    %v1317 = vld [vmem:[%s1301 + $0x78] sm:$0xff]
    %1318 = vmatprep.subr.mxu0 0.0
    %1319 = vmatpush1.msra.mxu0 %v1317
    %1320 = vmatprep.subr.mxu0 0.0
    %1321 = vmatpush1.msra.mxu0 %v1316
    %1322 = vmatprep.subr.mxu0 0.0
    %1323 = vmatpush1.msra.mxu0 %v1315
    %1324 = vmatprep.subr.mxu0 0.0
    %1325 = vmatpush1.msra.mxu0 %v1314
    %1326 = vmatprep.subr.mxu0 0.0
    %1327 = vmatpush1.msra.mxu0 %v1313
    %1328 = vmatprep.subr.mxu0 0.0
    %1329 = vmatpush1.msra.mxu0 %v1312
    %1330 = vmatprep.subr.mxu0 0.0
    %1331 = vmatpush1.msra.mxu0 %v1311
    %1332 = vmatprep.subr.mxu0 0.0
    %1333 = vmatpush1.msra.mxu0 %v1310
    %1334 = vmatprep.subr.mxu0 0.0
    %1335 = vmatpush1.msra.mxu0 %v1309
    %1336 = vmatprep.subr.mxu0 0.0
    %1337 = vmatpush1.msra.mxu0 %v1308
    %1338 = vmatprep.subr.mxu0 0.0
    %1339 = vmatpush1.msra.mxu0 %v1307
    %1340 = vmatprep.subr.mxu0 0.0
    %1341 = vmatpush1.msra.mxu0 %v1306
    %1342 = vmatprep.subr.mxu0 0.0
    %1343 = vmatpush1.msra.mxu0 %v1305
    %1344 = vmatprep.subr.mxu0 0.0
    %1345 = vmatpush1.msra.mxu0 %v1304
    %1346 = vmatprep.subr.mxu0 0.0
    %1347 = vmatpush1.msra.mxu0 %v1303
    %1348 = vmatprep.subr.mxu0 0.0
    %1349 = vmatpush1.msra.mxu0 %v1302
    %1350 = vmatprep.subr.mxu0 0.0
    %1351 = vmatpush2.msra.mxu0 0.0
    %1352 = vmatprep.subr.mxu0 0.0
    %1353 = vmatpush2.msra.mxu0 0.0
    %1354 = vmatprep.subr.mxu0 0.0
    %1355 = vmatpush2.msra.mxu0 0.0
    %1356 = vmatprep.subr.mxu0 0.0
    %1357 = vmatpush2.msra.mxu0 0.0
    %1358 = vmatprep.subr.mxu0 0.0
    %1359 = vmatpush2.msra.mxu0 0.0
    %1360 = vmatprep.subr.mxu0 0.0
    %1361 = vmatpush2.msra.mxu0 0.0
    %1362 = vmatprep.subr.mxu0 0.0
    %1363 = vmatpush2.msra.mxu0 0.0
    %1364 = vmatprep.subr.mxu0 0.0
    %1365 = vmatpush2.msra.mxu0 0.0
    %1366 = vmatprep.subr.mxu0 0.0
    %1367 = vmatpush2.msra.mxu0 0.0
    %1368 = vmatprep.subr.mxu0 0.0
    %1369 = vmatpush2.msra.mxu0 0.0
    %1370 = vmatprep.subr.mxu0 0.0
    %1371 = vmatpush2.msra.mxu0 0.0
    %1372 = vmatprep.subr.mxu0 0.0
    %1373 = vmatpush2.msra.mxu0 0.0
    %1374 = vmatprep.subr.mxu0 0.0
    %1375 = vmatpush2.msra.mxu0 0.0
    %1376 = vmatprep.subr.mxu0 0.0
    %1377 = vmatpush2.msra.mxu0 0.0
    %1378 = vmatprep.subr.mxu0 0.0
    %1379 = vmatpush2.msra.mxu0 0.0
    %1380 = vmatprep.subr.mxu0 0.0
    %1381 = vmatpush2.msra.mxu0 0.0
    %1382 = vmatprep.mubr.f32.mxu0 0.0
    %1383 = vmatmul.mubr.f32.gmra.mxu0 %v1300
    %v1384 = vpop.f32.mrf.mxu0
    %v1385 = vadd.f32 0.0, %v1384
    %v1386 = vpop.f32.mrf.mxu0
    %1387 = vdwg.mxu0
    %s1388 = scalar_lea.vmem [#allocation6], 384
    %v1389 = vld [vmem:[%s1388] sm:$0xff]
    %v1390 = vld [vmem:[%s1388 + $0x8] sm:$0xff]
    %v1391 = vld [vmem:[%s1388 + $0x10] sm:$0xff]
    %v1392 = vld [vmem:[%s1388 + $0x18] sm:$0xff]
    %v1393 = vld [vmem:[%s1388 + $0x20] sm:$0xff]
    %v1394 = vld [vmem:[%s1388 + $0x28] sm:$0xff]
    %v1395 = vld [vmem:[%s1388 + $0x30] sm:$0xff]
    %v1396 = vld [vmem:[%s1388 + $0x38] sm:$0xff]
    %v1397 = vld [vmem:[%s1388 + $0x40] sm:$0xff]
    %v1398 = vld [vmem:[%s1388 + $0x48] sm:$0xff]
    %v1399 = vld [vmem:[%s1388 + $0x50] sm:$0xff]
    %v1400 = vld [vmem:[%s1388 + $0x58] sm:$0xff]
    %v1401 = vld [vmem:[%s1388 + $0x60] sm:$0xff]
    %v1402 = vld [vmem:[%s1388 + $0x68] sm:$0xff]
    %v1403 = vld [vmem:[%s1388 + $0x70] sm:$0xff]
    %v1404 = vld [vmem:[%s1388 + $0x78] sm:$0xff]
    %1405 = vmatprep.subr.mxu0 0.0
    %1406 = vmatpush1.msra.mxu0 %v1404
    %1407 = vmatprep.subr.mxu0 0.0
    %1408 = vmatpush1.msra.mxu0 %v1403
    %1409 = vmatprep.subr.mxu0 0.0
    %1410 = vmatpush1.msra.mxu0 %v1402
    %1411 = vmatprep.subr.mxu0 0.0
    %1412 = vmatpush1.msra.mxu0 %v1401
    %1413 = vmatprep.subr.mxu0 0.0
    %1414 = vmatpush1.msra.mxu0 %v1400
    %1415 = vmatprep.subr.mxu0 0.0
    %1416 = vmatpush1.msra.mxu0 %v1399
    %1417 = vmatprep.subr.mxu0 0.0
    %1418 = vmatpush1.msra.mxu0 %v1398
    %1419 = vmatprep.subr.mxu0 0.0
    %1420 = vmatpush1.msra.mxu0 %v1397
    %1421 = vmatprep.subr.mxu0 0.0
    %1422 = vmatpush1.msra.mxu0 %v1396
    %1423 = vmatprep.subr.mxu0 0.0
    %1424 = vmatpush1.msra.mxu0 %v1395
    %1425 = vmatprep.subr.mxu0 0.0
    %1426 = vmatpush1.msra.mxu0 %v1394
    %1427 = vmatprep.subr.mxu0 0.0
    %1428 = vmatpush1.msra.mxu0 %v1393
    %1429 = vmatprep.subr.mxu0 0.0
    %1430 = vmatpush1.msra.mxu0 %v1392
    %1431 = vmatprep.subr.mxu0 0.0
    %1432 = vmatpush1.msra.mxu0 %v1391
    %1433 = vmatprep.subr.mxu0 0.0
    %1434 = vmatpush1.msra.mxu0 %v1390
    %1435 = vmatprep.subr.mxu0 0.0
    %1436 = vmatpush1.msra.mxu0 %v1389
    %1437 = vmatprep.subr.mxu0 0.0
    %1438 = vmatpush2.msra.mxu0 0.0
    %1439 = vmatprep.subr.mxu0 0.0
    %1440 = vmatpush2.msra.mxu0 0.0
    %1441 = vmatprep.subr.mxu0 0.0
    %1442 = vmatpush2.msra.mxu0 0.0
    %1443 = vmatprep.subr.mxu0 0.0
    %1444 = vmatpush2.msra.mxu0 0.0
    %1445 = vmatprep.subr.mxu0 0.0
    %1446 = vmatpush2.msra.mxu0 0.0
    %1447 = vmatprep.subr.mxu0 0.0
    %1448 = vmatpush2.msra.mxu0 0.0
    %1449 = vmatprep.subr.mxu0 0.0
    %1450 = vmatpush2.msra.mxu0 0.0
    %1451 = vmatprep.subr.mxu0 0.0
    %1452 = vmatpush2.msra.mxu0 0.0
    %1453 = vmatprep.subr.mxu0 0.0
    %1454 = vmatpush2.msra.mxu0 0.0
    %1455 = vmatprep.subr.mxu0 0.0
    %1456 = vmatpush2.msra.mxu0 0.0
    %1457 = vmatprep.subr.mxu0 0.0
    %1458 = vmatpush2.msra.mxu0 0.0
    %1459 = vmatprep.subr.mxu0 0.0
    %1460 = vmatpush2.msra.mxu0 0.0
    %1461 = vmatprep.subr.mxu0 0.0
    %1462 = vmatpush2.msra.mxu0 0.0
    %1463 = vmatprep.subr.mxu0 0.0
    %1464 = vmatpush2.msra.mxu0 0.0
    %1465 = vmatprep.subr.mxu0 0.0
    %1466 = vmatpush2.msra.mxu0 0.0
    %1467 = vmatprep.subr.mxu0 0.0
    %1468 = vmatpush2.msra.mxu0 0.0
    %1469 = vmatprep.mubr.f32.mxu0 0.0
    %1470 = vmatmul.mubr.f32.gmra.mxu0 %v1300
    %v1471 = vpop.f32.mrf.mxu0
    %v1472 = vadd.f32 0.0, %v1471
    %v1473 = vpop.f32.mrf.mxu0
    %1474 = vdwg.mxu0
    %v1475 = vmax.f32 %v1385, %v1472
    %v1476 = vadd.f32 %v1149, %v1475
    %1477 = vst [vmem:[%s8] sm:$0xff] %v1476
    // Predicated region
    $region38: #{forward.1} parent=1 // pred_check
      _
    $region39: #{forward.1} parent=1 // pred_check_branch
      %1479 = sbr.rel (0) target = $region41
    $region40: #{forward.1} parent=1 // pred_region
      _
    $region41: #{forward.1} parent=1 // pred_fallthru
      _
    // Predicated region
    $region42: #{forward.1} parent=1 // pred_check
      _
    $region43: #{forward.1} parent=1 // pred_check_branch
      %1481 = sbr.rel (0) target = $region45
    $region44: #{forward.1} parent=1 // pred_region
      _
    $region45: #{forward.1} parent=1 // pred_fallthru
      _
    // Predicated region
    $region46: #{forward.1} parent=1 // pred_check
      _
    $region47: #{forward.1} parent=1 // pred_check_branch
      %1483 = sbr.rel (0) target = $region49
    $region48: #{forward.1} parent=1 // pred_region
      _
    $region49: #{forward.1} parent=1 // pred_fallthru
      _
    // Predicated region
    $region50: #{forward.1} parent=1 // pred_check
      _
    $region51: #{forward.1} parent=1 // pred_check_branch
      %1485 = sbr.rel (0) target = $region53
    $region52: #{forward.1} parent=1 // pred_region
      _
    $region53: #{forward.1} parent=1 // pred_fallthru
      _
    %1486 = vsyncpa [#allocation5], 1
    %1487 = vsyncpa [#allocation7], 1

</llo_original>
